<compile_context>
chip_gen: v7x
topology: tpu7x:2x2x1
jax: 0.10.0
libtpu: 0.0.40
codegen_flags: <defaults>
</compile_context>

<pallas_src>
import functools

import jax
import jax.numpy as jnp
from jax.experimental import pallas as pl
from jax.experimental.pallas import tpu as pltpu


def _vmem_limit(nbytes):
    # Explicit scoped-VMEM budget: 2x operand footprint + headroom, clamped to
    # [32 MiB (>= every generation's default scoped limit), 128 MiB].
    return int(min(max(2 * nbytes + (8 << 20), 32 << 20), 128 << 20))


# --------------------------------------------------------------------------
# Kernel A: embedding gather + GRU cell + dot attention + concat projection
# --------------------------------------------------------------------------
def gru_attn_kernel(
    tok_ref,    # (B,)      token ids, int32, SMEM
    emb_ref,    # (vocab,H) embedding table, f32, HBM (pl.ANY)
    h_ref,      # (B, H)    previous hidden state, f32
    enc_ref,    # (B, L, H) encoder outputs, bf16 (batch-major)
    wih_ref,    # (H, 3H)   GRU input-to-hidden (r|z|n), transposed, bf16
    whh_ref,    # (H, 3H)   GRU hidden-to-hidden (r|z|n), transposed, bf16
    bih_ref,    # (1, 3H)   f32
    bhh_ref,    # (1, 3H)   f32
    wch_ref,    # (H, H)    concat Linear, rows multiplying rnn_output, bf16
    wcc_ref,    # (H, H)    concat Linear, rows multiplying context, bf16
    bc_ref,     # (1, H)    f32
    cat_ref,    # (B, H)    out: tanh(concat Linear), bf16
    hid_ref,    # (B, H)    out: new hidden state, f32 (aliased onto h_ref)
    xbuf,       # (B, H)    scratch: gathered embedding rows, f32
    sem,        # (B,)      DMA semaphores for the row gather
):
    B, H = h_ref.shape
    wdt = enc_ref.dtype                    # matmul operand dtype (bf16)

    # ---- fused embedding gather: issue all B row DMAs, then wait ----
    for b in range(B):
        pltpu.make_async_copy(emb_ref.at[pl.ds(tok_ref[b], 1), :],
                              xbuf.at[pl.ds(b, 1), :], sem.at[b]).start()
    for b in range(B):
        pltpu.make_async_copy(emb_ref.at[pl.ds(tok_ref[b], 1), :],
                              xbuf.at[pl.ds(b, 1), :], sem.at[b]).wait()
    # TODO(synk): nn.Dropout(dropout) on the embedding is identity in eval mode;
    # training-time masking is not implemented.
    x = xbuf[...].astype(wdt)              # (B, H)
    h = h_ref[...]                         # (B, H) f32

    # ---- GRU cell (PyTorch gate ordering r, z, n); MXU matmuls, f32 accumulate ----
    gi = jnp.dot(x, wih_ref[...], preferred_element_type=jnp.float32) + bih_ref[...]
    gh = jnp.dot(h.astype(wdt), whh_ref[...], preferred_element_type=jnp.float32) + bhh_ref[...]
    rz = jax.nn.sigmoid(gi[:, : 2 * H] + gh[:, : 2 * H])      # r and z together
    r, z = rz[:, :H], rz[:, H:]
    n = jnp.tanh(gi[:, 2 * H:] + r * gh[:, 2 * H:])
    h_new = (1.0 - z) * n + z * h                             # (B, H) f32
    hid_ref[...] = h_new

    # ---- dot-product attention on the MXU (batched matmuls, no broadcast temps) ----
    enc = enc_ref[...]                                        # (B, L, H) bf16
    h3 = h_new.astype(wdt)[:, None, :]                        # (B, 1, H)
    s = jnp.einsum("bqh,bkh->bqk", h3, enc,
                   preferred_element_type=jnp.float32)        # (B, 1, L)
    s = s - jnp.max(s, axis=-1, keepdims=True)
    p = jnp.exp(s)
    attn = p / jnp.sum(p, axis=-1, keepdims=True)             # exact normalization
    context = jnp.einsum("bqk,bkh->bqh", attn.astype(wdt), enc,
                         preferred_element_type=jnp.float32)[:, 0, :]   # (B, H) f32

    # ---- concat Linear + tanh, without materializing a (B, 2H) concatenate ----
    pre = (jnp.dot(h_new.astype(wdt), wch_ref[...], preferred_element_type=jnp.float32)
           + jnp.dot(context.astype(wdt), wcc_ref[...], preferred_element_type=jnp.float32)
           + bc_ref[...])
    cat_ref[...] = jnp.tanh(pre).astype(cat_ref.dtype)


# --------------------------------------------------------------------------
# Kernel B: vocab projection (int8 weight stream) + fused softmax reductions,
# gridded over lane-aligned vocab tiles.
# --------------------------------------------------------------------------
def vocab_proj_kernel(c_ref, wq_ref, scale_ref, bo_ref,
                      logits_ref, tmax_ref, tsum_ref):
    # c_ref:     (B, H)          bf16
    # wq_ref:    (1, H, tile_v)  int8
    # scale_ref: (1, 1, tile_v)  f32   per-column dequant scale
    # bo_ref:    (1, 1, tile_v)  f32   bias (-1e30 on padded columns)
    # logits_ref:(B, tile_v)     f32
    # tmax_ref:  (1, B, 1)       f32   per-tile row max
    # tsum_ref:  (1, B, 1)       f32   per-tile row sum of exp(logit - max)
    w = wq_ref[0].astype(jnp.float32)                       # dequant scale applied post-matmul
    c = c_ref[...].astype(jnp.float32)
    acc = jnp.dot(c, w, preferred_element_type=jnp.float32)  # (B, tile_v)
    logits = acc * scale_ref[0] + bo_ref[0]
    logits_ref[...] = logits
    m = jnp.max(logits, axis=-1, keepdims=True)               # (B, 1)
    tmax_ref[0] = m
    tsum_ref[0] = jnp.sum(jnp.exp(logits - m), axis=-1, keepdims=True)


def _pick_vocab_tile(V, H):
    # Lane-aligned tile sized so the double-buffered int8 weight stream stays
    # within an 8 MiB budget (comfortable on every generation, incl. v7x 64 MiB).
    v_lane = -(-V // 128) * 128
    for t in (2048, 1024, 512, 256, 128):
        if t <= v_lane and 2 * H * t <= (8 << 20):
            return t
    return 128


# --------------------------------------------------------------------------
# One-time preparation (hoisted out of the per-token decode step)
# --------------------------------------------------------------------------
def prepare_params(params, weight_dtype=jnp.bfloat16):
    H = params["w_hh"].shape[1]
    V = params["w_out"].shape[0]
    tile_v = _pick_vocab_tile(V, H)
    n_tiles = -(-V // tile_v)
    v_pad = n_tiles * tile_v

    # int8 per-output-column symmetric quantization of the (H, V) vocab projection,
    # padded to a multiple of tile_v (padded bias -> -1e30 so those columns vanish).
    w_out_t = params["w_out"].astype(jnp.float32).T                     # (H, V)
    w_out_t = jnp.pad(w_out_t, ((0, 0), (0, v_pad - V)))
    col_scale = jnp.maximum(jnp.max(jnp.abs(w_out_t), axis=0), 1e-8) / 127.0
    wo_q = jnp.clip(jnp.round(w_out_t / col_scale[None, :]), -127.0, 127.0).astype(jnp.int8)
    b_out = jnp.pad(params["b_out"].astype(jnp.float32), (0, v_pad - V),
                    constant_values=-1e30)

    return {
        "embedding": params["embedding"].astype(jnp.float32),           # only B rows gathered
        "wih_t": params["w_ih"].T.astype(weight_dtype),                 # (H, 3H)
        "whh_t": params["w_hh"].T.astype(weight_dtype),                 # (H, 3H)
        "bih": params["b_ih"][None, :].astype(jnp.float32),             # (1, 3H)
        "bhh": params["b_hh"][None, :].astype(jnp.float32),             # (1, 3H)
        "wc_h_t": params["w_concat"][:, :H].T.astype(weight_dtype),     # (H, H)
        "wc_c_t": params["w_concat"][:, H:].T.astype(weight_dtype),     # (H, H)
        "bc": params["b_concat"][None, :].astype(jnp.float32),          # (1, H)
        "wo_q": wo_q.reshape(H, n_tiles, tile_v).transpose(1, 0, 2),    # (n_tiles, H, tile_v) int8
        "wo_scale": col_scale.reshape(n_tiles, 1, tile_v),              # (n_tiles, 1, tile_v)
        "bo": b_out.reshape(n_tiles, 1, tile_v),                        # (n_tiles, 1, tile_v)
    }


def prepare_encoder_outputs(encoder_outputs, weight_dtype=jnp.bfloat16):
    # (L, B, H) time-major -> (B, L, H) batch-major, done once per sequence.
    return jnp.transpose(encoder_outputs, (1, 0, 2)).astype(weight_dtype)


# --------------------------------------------------------------------------
# Single decode step
# --------------------------------------------------------------------------
@functools.partial(jax.jit, static_argnames=("out_size",))
def attn_decoder_step(prepped, input_step, last_hidden, enc_bm, *, out_size):
    """
    input_step  : (1, B) int32 token ids
    last_hidden : (1, B, H) float32
    enc_bm      : (B, L, H) bf16 (from prepare_encoder_outputs)
    out_size    : true vocab size V (static)
    returns (output (B, V) f32, hidden (1, B, H) f32)
    """
    B = input_step.shape[1]
    H = last_hidden.shape[2]
    L = enc_bm.shape[1]
    n_tiles, _, tile_v = prepped["wo_q"].shape
    v_pad = n_tiles * tile_v
    wbytes = 2  # bf16 streamed weights

    tok = input_step[0].astype(jnp.int32)            # (B,)
    h0 = last_hidden[0]                              # (B, H) f32

    vmem = pl.BlockSpec(memory_space=pltpu.MemorySpace.VMEM)
    smem = pl.BlockSpec(memory_space=pltpu.MemorySpace.SMEM)
    anyspace = pl.BlockSpec(memory_space=pl.ANY)     # embedding table stays in HBM

    # ---- Kernel A: embedding gather + GRU + attention + concat projection ----
    bytes_a = (B * H * 4                  # gathered embedding rows
               + B * H * 4                # previous hidden
               + B * L * H * wbytes       # encoder outputs
               + 2 * H * 3 * H * wbytes   # GRU weights
               + 2 * 3 * H * 4            # GRU biases
               + 2 * H * H * wbytes       # concat weights
               + H * 4                    # concat bias
               + B * H * wbytes + B * H * 4)   # outputs
    cost_a = pl.CostEstimate(
        flops=16 * B * H * H + 4 * B * L * H,
        transcendentals=B * (4 * H + L),
        bytes_accessed=bytes_a)
    concat_out, h_new = pl.pallas_call(
        gru_attn_kernel,
        out_shape=(
            jax.ShapeDtypeStruct((B, H), jnp.bfloat16),   # concat_out
            jax.ShapeDtypeStruct((B, H), jnp.float32),    # new hidden
        ),
        in_specs=[smem, anyspace] + [vmem] * 9,
        out_specs=(vmem, vmem),
        scratch_shapes=[pltpu.VMEM((B, H), jnp.float32),
                        pltpu.SemaphoreType.DMA((B,))],
        input_output_aliases={2: 1},   # reuse previous-hidden buffer for new hidden
        compiler_params=pltpu.CompilerParams(vmem_limit_bytes=_vmem_limit(bytes_a)),
        cost_estimate=cost_a,
    )(tok, prepped["embedding"], h0, enc_bm,
      prepped["wih_t"], prepped["whh_t"], prepped["bih"], prepped["bhh"],
      prepped["wc_h_t"], prepped["wc_c_t"], prepped["bc"])

    # ---- Kernel B: int8 weight stream over vocab tiles + fused softmax stats ----
    bytes_b = (B * H * 2
               + 2 * (H * tile_v * 1 + 2 * tile_v * 4 + B * tile_v * 4 + 2 * B * 4))
    cost_b = pl.CostEstimate(
        flops=2 * B * H * v_pad,
        transcendentals=B * v_pad,
        bytes_accessed=B * H * 2 + H * v_pad * 1 + 2 * v_pad * 4 + B * v_pad * 4)
    logits, tmax, tsum = pl.pallas_call(
        vocab_proj_kernel,
        out_shape=(
            jax.ShapeDtypeStruct((B, v_pad), jnp.float32),
            jax.ShapeDtypeStruct((n_tiles, B, 1), jnp.float32),
            jax.ShapeDtypeStruct((n_tiles, B, 1), jnp.float32),
        ),
        grid=(n_tiles,),
        in_specs=[
            pl.BlockSpec((B, H), lambda v: (0, 0)),
            pl.BlockSpec((1, H, tile_v), lambda v: (v, 0, 0)),
            pl.BlockSpec((1, 1, tile_v), lambda v: (v, 0, 0)),
            pl.BlockSpec((1, 1, tile_v), lambda v: (v, 0, 0)),
        ],
        out_specs=(
            pl.BlockSpec((B, tile_v), lambda v: (0, v)),
            pl.BlockSpec((1, B, 1), lambda v: (v, 0, 0)),
            pl.BlockSpec((1, B, 1), lambda v: (v, 0, 0)),
        ),
        # TODO(synk): on v7x, pltpu.CORE_PARALLEL on this axis shards the weight
        # stream across both TensorCores; "parallel" kept for portability here.
        compiler_params=pltpu.CompilerParams(
            dimension_semantics=("parallel",),
            vmem_limit_bytes=_vmem_limit(bytes_b)),
        cost_estimate=cost_b,
    )(concat_out, prepped["wo_q"], prepped["wo_scale"], prepped["bo"])

    # Final softmax over the vocab: per-tile reductions were fused into kernel B,
    # so this is a single elementwise pass over (B, V) (no extra max/sum passes).
    tile_max = tmax[:, :, 0]                                  # (n_tiles, B)
    tile_sum = tsum[:, :, 0]                                  # (n_tiles, B)
    gmax = jnp.max(tile_max, axis=0)                          # (B,)
    gsum = jnp.sum(tile_sum * jnp.exp(tile_max - gmax[None, :]), axis=0)   # (B,)
    output = jnp.exp(logits[:, :out_size] - gmax[:, None]) / gsum[:, None]
    return output, h_new[None, :, :]


# --------------------------------------------------------------------------
# Parameter init + pure-JAX reference (matches the PyTorch forward)
# --------------------------------------------------------------------------
def init_params(key, vocab_size, hidden_size, output_size):
    ks = jax.random.split(key, 9)
    scale = 0.1
    return {
        "embedding": scale * jax.random.normal(ks[0], (vocab_size, hidden_size), jnp.float32),
        "w_ih": scale * jax.random.normal(ks[1], (3 * hidden_size, hidden_size), jnp.float32),
        "w_hh": scale * jax.random.normal(ks[2], (3 * hidden_size, hidden_size), jnp.float32),
        "b_ih": scale * jax.random.normal(ks[3], (3 * hidden_size,), jnp.float32),
        "b_hh": scale * jax.random.normal(ks[4], (3 * hidden_size,), jnp.float32),
        "w_concat": scale * jax.random.normal(ks[5], (hidden_size, 2 * hidden_size), jnp.float32),
        "b_concat": scale * jax.random.normal(ks[6], (hidden_size,), jnp.float32),
        "w_out": scale * jax.random.normal(ks[7], (output_size, hidden_size), jnp.float32),
        "b_out": scale * jax.random.normal(ks[8], (output_size,), jnp.float32),
    }


def reference_forward(params, input_step, last_hidden, encoder_outputs):
    H = last_hidden.shape[2]
    x = params["embedding"][input_step[0]]               # (B, H)
    h = last_hidden[0]                                   # (B, H)
    gi = x @ params["w_ih"].T + params["b_ih"]
    gh = h @ params["w_hh"].T + params["b_hh"]
    i_r, i_z, i_n = gi[:, :H], gi[:, H:2 * H], gi[:, 2 * H:]
    h_r, h_z, h_n = gh[:, :H], gh[:, H:2 * H], gh[:, 2 * H:]
    r = jax.nn.sigmoid(i_r + h_r)
    z = jax.nn.sigmoid(i_z + h_z)
    n = jnp.tanh(i_n + r * h_n)
    h_new = (1.0 - z) * n + z * h                        # (B, H)
    scores = jnp.sum(h_new[None, :, :] * encoder_outputs, axis=2).T   # (B, L)
    attn = jax.nn.softmax(scores, axis=1)                             # (B, L)
    context = jnp.einsum("bl,lbh->bh", attn, encoder_outputs)
    concat_out = jnp.tanh(
        jnp.concatenate([h_new, context], axis=1) @ params["w_concat"].T + params["b_concat"]
    )
    logits = concat_out @ params["w_out"].T + params["b_out"]
    return jax.nn.softmax(logits, axis=1), h_new[None]


if __name__ == "__main__":
    # Small test shapes; benchmark at H>=512, L>=128, V>=16k, B>=8 for real numbers.
    B, H, L, V = 2, 32, 8, 16
    vocab_size = 64

    key = jax.random.PRNGKey(0)
    kp, ki, kh, ke = jax.random.split(key, 4)

    params = init_params(kp, vocab_size, H, V)
    input_step = jax.random.randint(ki, (1, B), 0, vocab_size, dtype=jnp.int32)
    last_hidden = 0.1 * jax.random.normal(kh, (1, B, H), jnp.float32)
    encoder_outputs = 0.1 * jax.random.normal(ke, (L, B, H), jnp.float32)

    # One-time preparation (transposes / casts / int8 quant hoisted out of the loop).
    prepped = prepare_params(params)
    enc_bm = prepare_encoder_outputs(encoder_outputs)

    out, hidden = attn_decoder_step(prepped, input_step, last_hidden, enc_bm, out_size=V)
    out, hidden = jax.block_until_ready((out, hidden))

    ref_out, ref_hidden = reference_forward(params, input_step, last_hidden, encoder_outputs)
    assert out.shape == (B, V) and hidden.shape == (1, B, H)
    # bf16 weight streaming + int8 vocab projection -> loosened tolerance vs f32 ref.
    assert jnp.allclose(out, ref_out, atol=2e-2, rtol=2e-2), \
        float(jnp.max(jnp.abs(out - ref_out)))
    assert jnp.allclose(hidden, ref_hidden, atol=2e-2, rtol=2e-2), \
        float(jnp.max(jnp.abs(hidden - ref_hidden)))
    assert jnp.allclose(jnp.sum(out, axis=-1), 1.0, atol=1e-3)

    print("KERNEL_OK")
</pallas_src>

<mosaic_0001>
module attributes {stable_mosaic.version = 11 : i64} {
  func.func @vocab_proj_kernel(%arg0: i32, %arg1: memref<2x32xbf16, #tpu.memory_space<vmem>>, %arg2: memref<1x32x128xi8, #tpu.memory_space<vmem>>, %arg3: memref<1x1x128xf32, #tpu.memory_space<vmem>>, %arg4: memref<1x1x128xf32, #tpu.memory_space<vmem>>, %arg5: memref<2x128xf32, #tpu.memory_space<vmem>>, %arg6: memref<1x2x1xf32, #tpu.memory_space<vmem>>, %arg7: memref<1x2x1xf32, #tpu.memory_space<vmem>>) attributes {dimension_semantics = [#tpu.dimension_semantics<parallel>], iteration_bounds = array<i64: 1>, scalar_prefetch = 0 : i64, scratch_operands = 0 : i64, tpu.core_type = #tpu.core_type<tc>, window_params = [{pipeline_mode = #tpu.pipeline_mode<synchronous>, transform_indices = @transform_0, window_bounds = array<i64: 2, 32>}, {transform_indices = @transform_1, window_bounds = array<i64: 1, 32, 128>}, {transform_indices = @transform_2, window_bounds = array<i64: 1, 1, 128>}, {transform_indices = @transform_3, window_bounds = array<i64: 1, 1, 128>}, {transform_indices = @transform_4, window_bounds = array<i64: 2, 128>}, {transform_indices = @transform_5, window_bounds = array<i64: 1, 2, 1>}, {transform_indices = @transform_6, window_bounds = array<i64: 1, 2, 1>}]} {
    %c0 = arith.constant 0 : index
    %c0_0 = arith.constant 0 : index
    %c0_1 = arith.constant 0 : index
    %0 = vector.load %arg2[%c0, %c0_0, %c0_1] : memref<1x32x128xi8, #tpu.memory_space<vmem>>, vector<1x32x128xi8>
    %1 = vector.shape_cast %0 : vector<1x32x128xi8> to vector<32x128xi8>
    %2 = arith.sitofp %1 : vector<32x128xi8> to vector<32x128xf32>
    %c0_2 = arith.constant 0 : index
    %c0_3 = arith.constant 0 : index
    %3 = vector.load %arg1[%c0_2, %c0_3] : memref<2x32xbf16, #tpu.memory_space<vmem>>, vector<2x32xbf16>
    %4 = arith.extf %3 : vector<2x32xbf16> to vector<2x32xf32>
    %cst = arith.constant dense<0.000000e+00> : vector<2x128xf32>
    %5 = tpu.matmul %4, %2, %cst {dimension_numbers = #tpu.dot_dimension_numbers<[1], [0], [0], [1], [0, 0, 1, 1], [], []>} : vector<2x32xf32>, vector<32x128xf32>, vector<2x128xf32> -> vector<2x128xf32>
    %c0_4 = arith.constant 0 : index
    %c0_5 = arith.constant 0 : index
    %c0_6 = arith.constant 0 : index
    %6 = vector.load %arg3[%c0_4, %c0_5, %c0_6] : memref<1x1x128xf32, #tpu.memory_space<vmem>>, vector<1x1x128xf32>
    %7 = vector.shape_cast %6 : vector<1x1x128xf32> to vector<1x128xf32>
    %8 = vector.broadcast %7 : vector<1x128xf32> to vector<2x128xf32>
    %9 = arith.mulf %5, %8 : vector<2x128xf32>
    %c0_7 = arith.constant 0 : index
    %c0_8 = arith.constant 0 : index
    %c0_9 = arith.constant 0 : index
    %10 = vector.load %arg4[%c0_7, %c0_8, %c0_9] : memref<1x1x128xf32, #tpu.memory_space<vmem>>, vector<1x1x128xf32>
    %11 = vector.shape_cast %10 : vector<1x1x128xf32> to vector<1x128xf32>
    %12 = vector.broadcast %11 : vector<1x128xf32> to vector<2x128xf32>
    %13 = arith.addf %9, %12 : vector<2x128xf32>
    %c0_10 = arith.constant 0 : index
    %c0_11 = arith.constant 0 : index
    %14 = vector.load %arg5[%c0_10, %c0_11] : memref<2x128xf32, #tpu.memory_space<vmem>>, vector<2x128xf32>
    tpu.vector_store %arg5[%c0_10, %c0_11], %13 {strides = array<i32>} : memref<2x128xf32, #tpu.memory_space<vmem>>, vector<2x128xf32>,
    %cst_12 = arith.constant dense<0xFF800000> : vector<2xf32>
    %15 = vector.multi_reduction <maximumf>, %13, %cst_12 [1] : vector<2x128xf32> to vector<2xf32>
    %16 = vector.shape_cast %15 : vector<2xf32> to vector<2x1xf32>
    %c0_13 = arith.constant 0 : index
    %c0_14 = arith.constant 0 : index
    %c0_15 = arith.constant 0 : index
    %17 = vector.load %arg6[%c0_13, %c0_14, %c0_15] : memref<1x2x1xf32, #tpu.memory_space<vmem>>, vector<1x2x1xf32>
    %18 = vector.shape_cast %17 : vector<1x2x1xf32> to vector<2x1xf32>
    %19 = vector.shape_cast %16 : vector<2x1xf32> to vector<1x2x1xf32>
    tpu.vector_store %arg6[%c0_13, %c0_14, %c0_15], %19 {strides = array<i32>} : memref<1x2x1xf32, #tpu.memory_space<vmem>>, vector<1x2x1xf32>,
    %20 = vector.broadcast %16 : vector<2x1xf32> to vector<2x128xf32>
    %21 = arith.subf %13, %20 : vector<2x128xf32>
    %22 = math.exp %21 : vector<2x128xf32>
    %cst_16 = arith.constant dense<0.000000e+00> : vector<2xf32>
    %23 = vector.multi_reduction <add>, %22, %cst_16 [1] : vector<2x128xf32> to vector<2xf32>
    %24 = vector.shape_cast %23 : vector<2xf32> to vector<2x1xf32>
    %c0_17 = arith.constant 0 : index
    %c0_18 = arith.constant 0 : index
    %c0_19 = arith.constant 0 : index
    %25 = vector.load %arg7[%c0_17, %c0_18, %c0_19] : memref<1x2x1xf32, #tpu.memory_space<vmem>>, vector<1x2x1xf32>
    %26 = vector.shape_cast %25 : vector<1x2x1xf32> to vector<2x1xf32>
    %27 = vector.shape_cast %24 : vector<2x1xf32> to vector<1x2x1xf32>
    tpu.vector_store %arg7[%c0_17, %c0_18, %c0_19], %27 {strides = array<i32>} : memref<1x2x1xf32, #tpu.memory_space<vmem>>, vector<1x2x1xf32>,
    return
  }
  func.func @transform_0(%arg0: i32) -> (i32, i32) {
    %c0_i32 = arith.constant 0 : i32
    %c0_i32_0 = arith.constant 0 : i32
    %c0_i32_1 = arith.constant 0 : i32
    return %c0_i32, %c0_i32_0 : i32, i32
  }
  func.func @transform_1(%arg0: i32) -> (i32, i32, i32) {
    %c0_i32 = arith.constant 0 : i32
    %c0_i32_0 = arith.constant 0 : i32
    %c0_i32_1 = arith.constant 0 : i32
    return %arg0, %c0_i32, %c0_i32_0 : i32, i32, i32
  }
  func.func @transform_2(%arg0: i32) -> (i32, i32, i32) {
    %c0_i32 = arith.constant 0 : i32
    %c0_i32_0 = arith.constant 0 : i32
    %c0_i32_1 = arith.constant 0 : i32
    return %arg0, %c0_i32, %c0_i32_0 : i32, i32, i32
  }
  func.func @transform_3(%arg0: i32) -> (i32, i32, i32) {
    %c0_i32 = arith.constant 0 : i32
    %c0_i32_0 = arith.constant 0 : i32
    %c0_i32_1 = arith.constant 0 : i32
    return %arg0, %c0_i32, %c0_i32_0 : i32, i32, i32
  }
  func.func @transform_4(%arg0: i32) -> (i32, i32) {
    %c0_i32 = arith.constant 0 : i32
    %c0_i32_0 = arith.constant 0 : i32
    return %c0_i32, %arg0 : i32, i32
  }
  func.func @transform_5(%arg0: i32) -> (i32, i32, i32) {
    %c0_i32 = arith.constant 0 : i32
    %c0_i32_0 = arith.constant 0 : i32
    %c0_i32_1 = arith.constant 0 : i32
    return %arg0, %c0_i32, %c0_i32_0 : i32, i32, i32
  }
  func.func @transform_6(%arg0: i32) -> (i32, i32, i32) {
    %c0_i32 = arith.constant 0 : i32
    %c0_i32_0 = arith.constant 0 : i32
    %c0_i32_1 = arith.constant 0 : i32
    return %arg0, %c0_i32, %c0_i32_0 : i32, i32, i32
  }
}

module attributes {stable_mosaic.version = 11 : i64} {
  func.func @gru_attn_kernel(%arg0: memref<2xi32, #tpu.memory_space<smem>>, %arg1: memref<64x32xf32, #tpu.memory_space<any>>, %arg2: memref<2x32xf32, #tpu.memory_space<vmem>>, %arg3: memref<2x8x32xbf16, #tpu.memory_space<vmem>>, %arg4: memref<32x96xbf16, #tpu.memory_space<vmem>>, %arg5: memref<32x96xbf16, #tpu.memory_space<vmem>>, %arg6: memref<1x96xf32, #tpu.memory_space<vmem>>, %arg7: memref<1x96xf32, #tpu.memory_space<vmem>>, %arg8: memref<32x32xbf16, #tpu.memory_space<vmem>>, %arg9: memref<32x32xbf16, #tpu.memory_space<vmem>>, %arg10: memref<1x32xf32, #tpu.memory_space<vmem>>, %arg11: memref<2x32xbf16, #tpu.memory_space<vmem>>, %arg12: memref<2x32xf32, #tpu.memory_space<vmem>>, %arg13: memref<2x32xf32, #tpu.memory_space<vmem>>, %arg14: memref<2x!tpu.dma_semaphore, #tpu.memory_space<semaphore_mem>>) attributes {dimension_semantics = [], scalar_prefetch = 0 : i64, scratch_operands = 2 : i64, tpu.core_type = #tpu.core_type<tc>} {
    %c0 = arith.constant 0 : index
    %0 = memref.load %arg0[%c0] : memref<2xi32, #tpu.memory_space<smem>>
    %c0_i32 = arith.constant 0 : i32
    %c0_i32_0 = arith.constant 0 : i32
    %1 = tpu.memref_slice %arg1[%0, %c0_i32_0] : memref<64x32xf32, #tpu.memory_space<any>> -> memref<1x32xf32, #tpu.memory_space<any>>
    %c0_i32_1 = arith.constant 0 : i32
    %c0_i32_2 = arith.constant 0 : i32
    %2 = tpu.memref_slice %arg13[%c0_i32_1, %c0_i32_2] : memref<2x32xf32, #tpu.memory_space<vmem>> -> memref<1x32xf32, #tpu.memory_space<vmem>>
    %3 = tpu.memref_slice %arg14[%c0_i32] : memref<2x!tpu.dma_semaphore, #tpu.memory_space<semaphore_mem>> -> memref<1x!tpu.dma_semaphore, #tpu.memory_space<semaphore_mem>>
    %4 = tpu.memref_squeeze %3 : memref<1x!tpu.dma_semaphore, #tpu.memory_space<semaphore_mem>> -> memref<!tpu.dma_semaphore, #tpu.memory_space<semaphore_mem>>
    tpu.enqueue_dma source(%1 : memref<1x32xf32, #tpu.memory_space<any>>) target(%2 : memref<1x32xf32, #tpu.memory_space<vmem>>) target_semaphore(%4 : memref<!tpu.dma_semaphore, #tpu.memory_space<semaphore_mem>>)
    %c1 = arith.constant 1 : index
    %5 = memref.load %arg0[%c1] : memref<2xi32, #tpu.memory_space<smem>>
    %c1_i32 = arith.constant 1 : i32
    %c0_i32_3 = arith.constant 0 : i32
    %6 = tpu.memref_slice %arg1[%5, %c0_i32_3] : memref<64x32xf32, #tpu.memory_space<any>> -> memref<1x32xf32, #tpu.memory_space<any>>
    %c1_i32_4 = arith.constant 1 : i32
    %c0_i32_5 = arith.constant 0 : i32
    %7 = tpu.memref_slice %arg13[%c1_i32_4, %c0_i32_5] : memref<2x32xf32, #tpu.memory_space<vmem>> -> memref<1x32xf32, #tpu.memory_space<vmem>>
    %8 = tpu.memref_slice %arg14[%c1_i32] : memref<2x!tpu.dma_semaphore, #tpu.memory_space<semaphore_mem>> -> memref<1x!tpu.dma_semaphore, #tpu.memory_space<semaphore_mem>>
    %9 = tpu.memref_squeeze %8 : memref<1x!tpu.dma_semaphore, #tpu.memory_space<semaphore_mem>> -> memref<!tpu.dma_semaphore, #tpu.memory_space<semaphore_mem>>
    tpu.enqueue_dma source(%6 : memref<1x32xf32, #tpu.memory_space<any>>) target(%7 : memref<1x32xf32, #tpu.memory_space<vmem>>) target_semaphore(%9 : memref<!tpu.dma_semaphore, #tpu.memory_space<semaphore_mem>>)
    %c0_6 = arith.constant 0 : index
    %10 = memref.load %arg0[%c0_6] : memref<2xi32, #tpu.memory_space<smem>>
    %c0_i32_7 = arith.constant 0 : i32
    %c0_i32_8 = arith.constant 0 : i32
    %11 = tpu.memref_slice %arg1[%10, %c0_i32_8] : memref<64x32xf32, #tpu.memory_space<any>> -> memref<1x32xf32, #tpu.memory_space<any>>
    %c0_i32_9 = arith.constant 0 : i32
    %c0_i32_10 = arith.constant 0 : i32
    %12 = tpu.memref_slice %arg13[%c0_i32_9, %c0_i32_10] : memref<2x32xf32, #tpu.memory_space<vmem>> -> memref<1x32xf32, #tpu.memory_space<vmem>>
    %13 = tpu.memref_slice %arg14[%c0_i32_7] : memref<2x!tpu.dma_semaphore, #tpu.memory_space<semaphore_mem>> -> memref<1x!tpu.dma_semaphore, #tpu.memory_space<semaphore_mem>>
    %14 = tpu.memref_squeeze %13 : memref<1x!tpu.dma_semaphore, #tpu.memory_space<semaphore_mem>> -> memref<!tpu.dma_semaphore, #tpu.memory_space<semaphore_mem>>
    tpu.wait_dma2 semaphore(%14 : memref<!tpu.dma_semaphore, #tpu.memory_space<semaphore_mem>>) src(%11 : memref<1x32xf32, #tpu.memory_space<any>>) dst(%12 : memref<1x32xf32, #tpu.memory_space<vmem>>)
    %c1_11 = arith.constant 1 : index
    %15 = memref.load %arg0[%c1_11] : memref<2xi32, #tpu.memory_space<smem>>
    %c1_i32_12 = arith.constant 1 : i32
    %c0_i32_13 = arith.constant 0 : i32
    %16 = tpu.memref_slice %arg1[%15, %c0_i32_13] : memref<64x32xf32, #tpu.memory_space<any>> -> memref<1x32xf32, #tpu.memory_space<any>>
    %c1_i32_14 = arith.constant 1 : i32
    %c0_i32_15 = arith.constant 0 : i32
    %17 = tpu.memref_slice %arg13[%c1_i32_14, %c0_i32_15] : memref<2x32xf32, #tpu.memory_space<vmem>> -> memref<1x32xf32, #tpu.memory_space<vmem>>
    %18 = tpu.memref_slice %arg14[%c1_i32_12] : memref<2x!tpu.dma_semaphore, #tpu.memory_space<semaphore_mem>> -> memref<1x!tpu.dma_semaphore, #tpu.memory_space<semaphore_mem>>
    %19 = tpu.memref_squeeze %18 : memref<1x!tpu.dma_semaphore, #tpu.memory_space<semaphore_mem>> -> memref<!tpu.dma_semaphore, #tpu.memory_space<semaphore_mem>>
    tpu.wait_dma2 semaphore(%19 : memref<!tpu.dma_semaphore, #tpu.memory_space<semaphore_mem>>) src(%16 : memref<1x32xf32, #tpu.memory_space<any>>) dst(%17 : memref<1x32xf32, #tpu.memory_space<vmem>>)
    %c0_16 = arith.constant 0 : index
    %c0_17 = arith.constant 0 : index
    %20 = vector.load %arg13[%c0_16, %c0_17] : memref<2x32xf32, #tpu.memory_space<vmem>>, vector<2x32xf32>
    %21 = arith.truncf %20 : vector<2x32xf32> to vector<2x32xbf16>
    %c0_18 = arith.constant 0 : index
    %c0_19 = arith.constant 0 : index
    %22 = vector.load %arg2[%c0_18, %c0_19] : memref<2x32xf32, #tpu.memory_space<vmem>>, vector<2x32xf32>
    %c0_20 = arith.constant 0 : index
    %c0_21 = arith.constant 0 : index
    %23 = vector.load %arg4[%c0_20, %c0_21] : memref<32x96xbf16, #tpu.memory_space<vmem>>, vector<32x96xbf16>
    %cst = arith.constant dense<0.000000e+00> : vector<2x96xf32>
    %24 = tpu.matmul %21, %23, %cst {dimension_numbers = #tpu.dot_dimension_numbers<[1], [0], [0], [1], [0, 0, 1, 1], [], []>} : vector<2x32xbf16>, vector<32x96xbf16>, vector<2x96xf32> -> vector<2x96xf32>
    %c0_22 = arith.constant 0 : index
    %c0_23 = arith.constant 0 : index
    %25 = vector.load %arg6[%c0_22, %c0_23] : memref<1x96xf32, #tpu.memory_space<vmem>>, vector<1x96xf32>
    %26 = vector.broadcast %25 : vector<1x96xf32> to vector<2x96xf32>
    %27 = arith.addf %24, %26 : vector<2x96xf32>
    %28 = arith.truncf %22 : vector<2x32xf32> to vector<2x32xbf16>
    %c0_24 = arith.constant 0 : index
    %c0_25 = arith.constant 0 : index
    %29 = vector.load %arg5[%c0_24, %c0_25] : memref<32x96xbf16, #tpu.memory_space<vmem>>, vector<32x96xbf16>
    %cst_26 = arith.constant dense<0.000000e+00> : vector<2x96xf32>
    %30 = tpu.matmul %28, %29, %cst_26 {dimension_numbers = #tpu.dot_dimension_numbers<[1], [0], [0], [1], [0, 0, 1, 1], [], []>} : vector<2x32xbf16>, vector<32x96xbf16>, vector<2x96xf32> -> vector<2x96xf32>
    %c0_27 = arith.constant 0 : index
    %c0_28 = arith.constant 0 : index
    %31 = vector.load %arg7[%c0_27, %c0_28] : memref<1x96xf32, #tpu.memory_space<vmem>>, vector<1x96xf32>
    %32 = vector.broadcast %31 : vector<1x96xf32> to vector<2x96xf32>
    %33 = arith.addf %30, %32 : vector<2x96xf32>
    %34 = vector.extract_strided_slice %27 {offsets = [0, 0], sizes = [2, 64], strides = [1, 1]} : vector<2x96xf32> to vector<2x64xf32>
    %35 = vector.extract_strided_slice %33 {offsets = [0, 0], sizes = [2, 64], strides = [1, 1]} : vector<2x96xf32> to vector<2x64xf32>
    %36 = arith.addf %34, %35 : vector<2x64xf32>
    %37 = arith.negf %36 : vector<2x64xf32>
    %38 = math.exp %37 : vector<2x64xf32>
    %cst_29 = arith.constant 1.000000e+00 : f32
    %39 = vector.broadcast %cst_29 : f32 to vector<2x64xf32>
    %40 = arith.addf %39, %38 : vector<2x64xf32>
    %41 = arith.divf %39, %40 : vector<2x64xf32>
    %42 = vector.extract_strided_slice %41 {offsets = [0, 0], sizes = [2, 32], strides = [1, 1]} : vector<2x64xf32> to vector<2x32xf32>
    %43 = vector.extract_strided_slice %41 {offsets = [0, 32], sizes = [2, 32], strides = [1, 1]} : vector<2x64xf32> to vector<2x32xf32>
    %44 = vector.extract_strided_slice %27 {offsets = [0, 64], sizes = [2, 32], strides = [1, 1]} : vector<2x96xf32> to vector<2x32xf32>
    %45 = vector.extract_strided_slice %33 {offsets = [0, 64], sizes = [2, 32], strides = [1, 1]} : vector<2x96xf32> to vector<2x32xf32>
    %46 = arith.mulf %42, %45 : vector<2x32xf32>
    %47 = arith.addf %44, %46 : vector<2x32xf32>
    %48 = math.tanh %47 : vector<2x32xf32>
    %cst_30 = arith.constant 1.000000e+00 : f32
    %49 = vector.broadcast %cst_30 : f32 to vector<2x32xf32>
    %50 = arith.subf %49, %43 : vector<2x32xf32>
    %51 = arith.mulf %50, %48 : vector<2x32xf32>
    %52 = arith.mulf %43, %22 : vector<2x32xf32>
    %53 = arith.addf %51, %52 : vector<2x32xf32>
    %c0_31 = arith.constant 0 : index
    %c0_32 = arith.constant 0 : index
    %54 = vector.load %arg12[%c0_31, %c0_32] : memref<2x32xf32, #tpu.memory_space<vmem>>, vector<2x32xf32>
    tpu.vector_store %arg12[%c0_31, %c0_32], %53 {strides = array<i32>} : memref<2x32xf32, #tpu.memory_space<vmem>>, vector<2x32xf32>,
    %c0_33 = arith.constant 0 : index
    %c0_34 = arith.constant 0 : index
    %c0_35 = arith.constant 0 : index
    %55 = vector.load %arg3[%c0_33, %c0_34, %c0_35] : memref<2x8x32xbf16, #tpu.memory_space<vmem>>, vector<2x8x32xbf16>
    %56 = arith.truncf %53 : vector<2x32xf32> to vector<2x32xbf16>
    %57 = vector.shape_cast %56 : vector<2x32xbf16> to vector<2x1x32xbf16>
    "tpu.trace_start"() <{level = 10 : i32, message = "bqh,bkh->bqk"}> : () -> ()
    %cst_36 = arith.constant dense<0.000000e+00> : vector<2x1x8xf32>
    %58 = tpu.matmul %57, %55, %cst_36 {dimension_numbers = #tpu.dot_dimension_numbers<[2], [2], [1], [1], [0, 0, 0, 1, 1, 1], [0], [0]>} : vector<2x1x32xbf16>, vector<2x8x32xbf16>, vector<2x1x8xf32> -> vector<2x1x8xf32>
    "tpu.trace_stop"() : () -> ()
    %cst_37 = arith.constant dense<0xFF800000> : vector<2x1xf32>
    %59 = vector.multi_reduction <maximumf>, %58, %cst_37 [2] : vector<2x1x8xf32> to vector<2x1xf32>
    %60 = vector.shape_cast %59 : vector<2x1xf32> to vector<2x1x1xf32>
    %61 = vector.broadcast %60 : vector<2x1x1xf32> to vector<2x1x8xf32>
    %62 = arith.subf %58, %61 : vector<2x1x8xf32>
    %63 = math.exp %62 : vector<2x1x8xf32>
    %cst_38 = arith.constant dense<0.000000e+00> : vector<2x1xf32>
    %64 = vector.multi_reduction <add>, %63, %cst_38 [2] : vector<2x1x8xf32> to vector<2x1xf32>
    %65 = vector.shape_cast %64 : vector<2x1xf32> to vector<2x1x1xf32>
    %66 = vector.broadcast %65 : vector<2x1x1xf32> to vector<2x1x8xf32>
    %67 = arith.divf %63, %66 : vector<2x1x8xf32>
    %68 = arith.truncf %67 : vector<2x1x8xf32> to vector<2x1x8xbf16>
    "tpu.trace_start"() <{level = 10 : i32, message = "bqk,bkh->bqh"}> : () -> ()
    %cst_39 = arith.constant dense<0.000000e+00> : vector<2x1x32xf32>
    %69 = tpu.matmul %68, %55, %cst_39 {dimension_numbers = #tpu.dot_dimension_numbers<[2], [1], [1], [2], [0, 0, 0, 1, 1, 2], [0], [0]>} : vector<2x1x8xbf16>, vector<2x8x32xbf16>, vector<2x1x32xf32> -> vector<2x1x32xf32>
    "tpu.trace_stop"() : () -> ()
    %70 = vector.shape_cast %69 : vector<2x1x32xf32> to vector<2x32xf32>
    %71 = arith.truncf %53 : vector<2x32xf32> to vector<2x32xbf16>
    %c0_40 = arith.constant 0 : index
    %c0_41 = arith.constant 0 : index
    %72 = vector.load %arg8[%c0_40, %c0_41] : memref<32x32xbf16, #tpu.memory_space<vmem>>, vector<32x32xbf16>
    %cst_42 = arith.constant dense<0.000000e+00> : vector<2x32xf32>
    %73 = tpu.matmul %71, %72, %cst_42 {dimension_numbers = #tpu.dot_dimension_numbers<[1], [0], [0], [1], [0, 0, 1, 1], [], []>} : vector<2x32xbf16>, vector<32x32xbf16>, vector<2x32xf32> -> vector<2x32xf32>
    %74 = arith.truncf %70 : vector<2x32xf32> to vector<2x32xbf16>
    %c0_43 = arith.constant 0 : index
    %c0_44 = arith.constant 0 : index
    %75 = vector.load %arg9[%c0_43, %c0_44] : memref<32x32xbf16, #tpu.memory_space<vmem>>, vector<32x32xbf16>
    %cst_45 = arith.constant dense<0.000000e+00> : vector<2x32xf32>
    %76 = tpu.matmul %74, %75, %cst_45 {dimension_numbers = #tpu.dot_dimension_numbers<[1], [0], [0], [1], [0, 0, 1, 1], [], []>} : vector<2x32xbf16>, vector<32x32xbf16>, vector<2x32xf32> -> vector<2x32xf32>
    %77 = arith.addf %73, %76 : vector<2x32xf32>
    %c0_46 = arith.constant 0 : index
    %c0_47 = arith.constant 0 : index
    %78 = vector.load %arg10[%c0_46, %c0_47] : memref<1x32xf32, #tpu.memory_space<vmem>>, vector<1x32xf32>
    %79 = vector.broadcast %78 : vector<1x32xf32> to vector<2x32xf32>
    %80 = arith.addf %77, %79 : vector<2x32xf32>
    %81 = math.tanh %80 : vector<2x32xf32>
    %82 = arith.truncf %81 : vector<2x32xf32> to vector<2x32xbf16>
    %c0_48 = arith.constant 0 : index
    %c0_49 = arith.constant 0 : index
    %83 = vector.load %arg11[%c0_48, %c0_49] : memref<2x32xbf16, #tpu.memory_space<vmem>>, vector<2x32xbf16>
    tpu.vector_store %arg11[%c0_48, %c0_49], %82 {strides = array<i32>} : memref<2x32xbf16, #tpu.memory_space<vmem>>, vector<2x32xbf16>,
    return
  }
}

</mosaic_0001>

<llo_original>
// kernel: attn_decoder_step.3
$region0: #{attn_decoder_step.3}
  #allocation0 [shape = 'u32[]', space=smem, size = 0x4, offset = 0x4, fixed_abs, tag = 'smem constant byte address 0x4 - core index']
  #allocation1 [shape = 'u32[144,128]{1,0:T(1,128)}', space=vmem, size = 0x12000, scoped, tag = 'internal scratch']
  %s0 = inlined_call_operand.vmem [shape: bf16[2,32], index: 0, kind: input, shape index: {}]
  %s1 = inlined_call_operand.vmem [shape: s8[1,32,128], index: 1, kind: input, shape index: {}]
  %s2 = inlined_call_operand.vmem [shape: f32[1,1,128], index: 2, kind: input, shape index: {}]
  %s3 = inlined_call_operand.vmem [shape: f32[1,1,128], index: 3, kind: input, shape index: {}]
  %s4 = inlined_call_operand.vmem [shape: f32[2,128], index: 4, kind: output, shape index: {0}]
  %s5 = inlined_call_operand.vmem [shape: f32[1,2,1], index: 5, kind: output, shape index: {1}]
  %s6 = inlined_call_operand.vmem [shape: f32[1,2,1], index: 6, kind: output, shape index: {2}]
  %7 = xla_tuple %s4, %s5, %s6
  %s8 = sld [smem:[#allocation0]]
  $region42: #{attn_decoder_step.3} parent=0
    _
  %s10 = ssub.s32 1, %s8
  %s11 = scalar_select 0, %s10, %s8
  // Predicated region
  $region2: #{attn_decoder_step.3} parent=0 // pred_check
    _
  $region3: #{attn_decoder_step.3} parent=0 // pred_check_branch
    %13 = sbr.rel (0) target = $region5
  $region4: #{attn_decoder_step.3} parent=0 // pred_region
    _
  $region5: #{attn_decoder_step.3} parent=0 // pred_fallthru
    _
  // Predicated region
  $region6: #{attn_decoder_step.3} parent=0 // pred_check
    _
  $region7: #{attn_decoder_step.3} parent=0 // pred_check_branch
    %15 = sbr.rel (0) target = $region9
  $region8: #{attn_decoder_step.3} parent=0 // pred_region
    _
  $region9: #{attn_decoder_step.3} parent=0 // pred_fallthru
    _
  // Predicated region
  $region10: #{attn_decoder_step.3} parent=0 // pred_check
    _
  $region11: #{attn_decoder_step.3} parent=0 // pred_check_branch
    %17 = sbr.rel (0) target = $region13
  $region12: #{attn_decoder_step.3} parent=0 // pred_region
    _
  $region13: #{attn_decoder_step.3} parent=0 // pred_fallthru
    _
  // Predicated region
  $region14: #{attn_decoder_step.3} parent=0 // pred_check
    _
  $region15: #{attn_decoder_step.3} parent=0 // pred_check_branch
    %19 = sbr.rel (0) target = $region17
  $region16: #{attn_decoder_step.3} parent=0 // pred_region
    _
  $region17: #{attn_decoder_step.3} parent=0 // pred_fallthru
    _
  %v20 = vld [vmem:[%s1] sm:$0xff]
  %v21 = vunpack.c.0.s8 %v20
  %v22 = vunpack.c.1.s8 %v20
  %v23 = vunpack.c.2.s8 %v20
  %v24 = vunpack.c.3.s8 %v20
  %v25 = vcvt.s32.f32 %v21
  %v26 = vcvt.s32.f32 %v22
  %v27 = vcvt.s32.f32 %v23
  %v28 = vcvt.s32.f32 %v24
  %v29 = vld [vmem:[%s0] sm:$0x1]
  %v30 = vunpack.c.l.bf16 %v29
  %vm31 = vcmask 261120
  %v33 = vsel %vm31, %v30, 0
  %35 = vmatprep.subr.mxu0 0.0
  %36 = vmatpush1.msra.mxu0 %v25
  %37 = vmatprep.subr.mxu0 0.0
  %38 = vmatpush1.msra.mxu0 %v26
  %39 = vmatprep.subr.mxu0 0.0
  %40 = vmatpush1.msra.mxu0 %v27
  %41 = vmatprep.subr.mxu0 0.0
  %42 = vmatpush1.msra.mxu0 %v28
  %43 = vmatprep.subr.mxu0 0.0
  %44 = vmatpush1.msra.mxu0 0.0
  %45 = vmatprep.subr.mxu0 0.0
  %46 = vmatpush1.msra.mxu0 0.0
  %47 = vmatprep.subr.mxu0 0.0
  %48 = vmatpush1.msra.mxu0 0.0
  %49 = vmatprep.subr.mxu0 0.0
  %50 = vmatpush1.msra.mxu0 0.0
  %51 = vmatprep.subr.mxu0 0.0
  %52 = vmatpush1.msra.mxu0 0.0
  %53 = vmatprep.subr.mxu0 0.0
  %54 = vmatpush1.msra.mxu0 0.0
  %55 = vmatprep.subr.mxu0 0.0
  %56 = vmatpush1.msra.mxu0 0.0
  %57 = vmatprep.subr.mxu0 0.0
  %58 = vmatpush1.msra.mxu0 0.0
  %59 = vmatprep.subr.mxu0 0.0
  %60 = vmatpush1.msra.mxu0 0.0
  %61 = vmatprep.subr.mxu0 0.0
  %62 = vmatpush1.msra.mxu0 0.0
  %63 = vmatprep.subr.mxu0 0.0
  %64 = vmatpush1.msra.mxu0 0.0
  %65 = vmatprep.subr.mxu0 0.0
  %66 = vmatpush1.msra.mxu0 0.0
  %67 = vmatprep.subr.mxu0 0.0
  %68 = vmatpush1.msra.mxu0 0.0
  %69 = vmatprep.subr.mxu0 0.0
  %70 = vmatpush1.msra.mxu0 0.0
  %71 = vmatprep.subr.mxu0 0.0
  %72 = vmatpush1.msra.mxu0 0.0
  %73 = vmatprep.subr.mxu0 0.0
  %74 = vmatpush1.msra.mxu0 0.0
  %75 = vmatprep.subr.mxu0 0.0
  %76 = vmatpush1.msra.mxu0 0.0
  %77 = vmatprep.subr.mxu0 0.0
  %78 = vmatpush1.msra.mxu0 0.0
  %79 = vmatprep.subr.mxu0 0.0
  %80 = vmatpush1.msra.mxu0 0.0
  %81 = vmatprep.subr.mxu0 0.0
  %82 = vmatpush1.msra.mxu0 0.0
  %83 = vmatprep.subr.mxu0 0.0
  %84 = vmatpush1.msra.mxu0 0.0
  %85 = vmatprep.subr.mxu0 0.0
  %86 = vmatpush1.msra.mxu0 0.0
  %87 = vmatprep.subr.mxu0 0.0
  %88 = vmatpush1.msra.mxu0 0.0
  %89 = vmatprep.subr.mxu0 0.0
  %90 = vmatpush1.msra.mxu0 0.0
  %91 = vmatprep.subr.mxu0 0.0
  %92 = vmatpush1.msra.mxu0 0.0
  %93 = vmatprep.subr.mxu0 0.0
  %94 = vmatpush1.msra.mxu0 0.0
  %95 = vmatprep.subr.mxu0 0.0
  %96 = vmatpush1.msra.mxu0 0.0
  %97 = vmatprep.subr.mxu0 0.0
  %98 = vmatpush1.msra.mxu0 0.0
  %99 = vmatprep.mubr.f32.mxu0 0.0
  %100 = vmatmul.mubr.f32.gmra.mrb[0].mxu0 %v33
  %v101 = vpop.f32.mrb[0].mxu0
  %v102 = vadd.f32 0.0, %v101
  %v103 = vpop.f32.mrb[0].mxu0
  %104 = vdwg.mxu0
  %v105 = vld [vmem:[%s2] sm:$0x1]
  %v107 = vlaneseq
  %v108 = vshrl.u32 %v107, 7
  %v109 = vsub.s32 0, %v108
  %v110 = vrot.slane %v105, %v109
  %v112 = vmul.f32 %v102, %v110
  %v113 = vld [vmem:[%s3] sm:$0x1]
  %v115 = vlaneseq
  %v116 = vshrl.u32 %v115, 7
  %v117 = vsub.s32 0, %v116
  %v118 = vrot.slane %v113, %v117
  %v120 = vadd.f32 %v112, %v118
  %121 = vst [vmem:[%s4] sm:$0x3] %v120
  %vm122 = vcmask 1041408
  %v123 = vsel %vm122, %v120, -inf
  %124 = vmax.xlane.f32.xlu0 %v123
  %v125 = vpop.xlane.xlu0 %124
  %vm126 = vcmask 1024
  %127 = vst.msk [vmem:[%s5] sm:$0x3] %vm126, %v125
  %v128 = vsub.f32 %v120, %v125
  %v129 = vmul.f32 %v128, 1.442695
  %v130 = vpow.pop %v129
  %v131 = vsel %vm122, %v130, 0.0
  %132 = vadd.xlane.f32.xlu0 %v131
  %v133 = vpop.xlane.xlu0 %132
  %134 = vst.msk [vmem:[%s6] sm:$0x3] %vm126, %v133
  // Predicated region
  $region18: #{attn_decoder_step.3} parent=0 // pred_check
    _
  $region19: #{attn_decoder_step.3} parent=0 // pred_check_branch
    %136 = sbr.rel (0) target = $region21
  $region20: #{attn_decoder_step.3} parent=0 // pred_region
    _
  $region21: #{attn_decoder_step.3} parent=0 // pred_fallthru
    _
  // Predicated region
  $region22: #{attn_decoder_step.3} parent=0 // pred_check
    _
  $region23: #{attn_decoder_step.3} parent=0 // pred_check_branch
    %138 = sbr.rel (0) target = $region25
  $region24: #{attn_decoder_step.3} parent=0 // pred_region
    _
  $region25: #{attn_decoder_step.3} parent=0 // pred_fallthru
    _
  // Predicated region
  $region26: #{attn_decoder_step.3} parent=0 // pred_check
    _
  $region27: #{attn_decoder_step.3} parent=0 // pred_check_branch
    %140 = sbr.rel (0) target = $region29
  $region28: #{attn_decoder_step.3} parent=0 // pred_region
    _
  $region29: #{attn_decoder_step.3} parent=0 // pred_fallthru
    _
  // Predicated region
  $region30: #{attn_decoder_step.3} parent=0 // pred_check
    _
  $region31: #{attn_decoder_step.3} parent=0 // pred_check_branch
    %142 = sbr.rel (0) target = $region33
  $region32: #{attn_decoder_step.3} parent=0 // pred_region
    _
  $region33: #{attn_decoder_step.3} parent=0 // pred_fallthru
    _
  // Predicated region
  $region34: #{attn_decoder_step.3} parent=0 // pred_check
    _
  $region35: #{attn_decoder_step.3} parent=0 // pred_check_branch
    %144 = sbr.rel (0) target = $region37
  $region36: #{attn_decoder_step.3} parent=0 // pred_region
    _
  $region37: #{attn_decoder_step.3} parent=0 // pred_fallthru
    _
  // Predicated region
  $region38: #{attn_decoder_step.3} parent=0 // pred_check
    _
  $region39: #{attn_decoder_step.3} parent=0 // pred_check_branch
    %146 = sbr.rel (0) target = $region41
  $region40: #{attn_decoder_step.3} parent=0 // pred_region
    _
  $region41: #{attn_decoder_step.3} parent=0 // pred_fallthru
    _

// kernel: attn_decoder_step.2
$region0: #{attn_decoder_step.2}
  #allocation0 [shape = 'u32[]', space=smem, size = 0x4, offset = 0x4, fixed_abs, tag = 'smem constant byte address 0x4 - core index']
  #allocation1 [shape = 'u32[144,128]{1,0:T(1,128)}', space=vmem, size = 0x12000, scoped, tag = 'internal scratch']
  #allocation2 [shape = 'f32[2,32]{1,0:T(2,128)}', space=vmem, size = 0x400, scoped, tag = 'scratch operand']
  #allocation3 [shape = 's32[2]{0}', space=sflag, size = 0x8, scoped, tag = 'scratch operand']
  #allocation6 [shape = 's32[]', space=sflag, size = 0x4, offset = 0, fixed_abs, tag = 'sflag constant byte address 0x0 - dummy sync flag']
  #allocation7 [shape = 's32[]', space=sflag, size = 0x4, offset = 0, fixed_abs, tag = 'sflag constant byte address 0x0 - dummy sync flag']
  %s0 = inlined_call_operand.vmem [shape: s32[2], index: 0, kind: input, shape index: {}]
  %s1 = inlined_call_operand.vmem [shape: f32[64,32], index: 1, kind: input, shape index: {}]
  %s2 = inlined_call_operand.vmem [shape: f32[2,32], index: 2, kind: input, shape index: {}, may-alias: {2,12}]
  %s3 = inlined_call_operand.vmem [shape: bf16[2,8,32], index: 3, kind: input, shape index: {}]
  %s4 = inlined_call_operand.vmem [shape: bf16[32,96], index: 4, kind: input, shape index: {}]
  %s5 = inlined_call_operand.vmem [shape: bf16[32,96], index: 5, kind: input, shape index: {}]
  %s6 = inlined_call_operand.vmem [shape: f32[1,96], index: 6, kind: input, shape index: {}]
  %s7 = inlined_call_operand.vmem [shape: f32[1,96], index: 7, kind: input, shape index: {}]
  %s8 = inlined_call_operand.vmem [shape: bf16[32,32], index: 8, kind: input, shape index: {}]
  %s9 = inlined_call_operand.vmem [shape: bf16[32,32], index: 9, kind: input, shape index: {}]
  %s10 = inlined_call_operand.vmem [shape: f32[1,32], index: 10, kind: input, shape index: {}]
  %s11 = inlined_call_operand.vmem [shape: bf16[2,32], index: 11, kind: output, shape index: {0}]
  %s12 = inlined_call_operand.vmem [shape: f32[2,32], index: 12, kind: output, shape index: {1}, may-alias: {2,12}]
  %13 = xla_tuple %s11, %s12
  %s14 = sld [smem:[#allocation0]]
  $region122: #{attn_decoder_step.2} parent=0
    _
  %s16 = ssub.s32 1, %s14
  %s17 = scalar_select 0, %s16, %s14
  $region1: #{attn_decoder_step.2} parent=0
    #allocation4 [shape = 'u8[512]{0}', space=smem, size = 0x200, scoped, tag = 'input window, operand 0, single buffered']
    #allocation5 [shape = 's32[1]{0}', space=sflag, size = 0x4, scoped, tag = 'scoped memory for attn_decoder_step.2']
    %18 = vsyncpa [#allocation5], 0
    // Predicated region
    $region2: #{attn_decoder_step.2} parent=1 // pred_check
      _
    $region3: #{attn_decoder_step.2} parent=1 // pred_check_branch
      %20 = sbr.rel (0) target = $region5
    $region4: #{attn_decoder_step.2} parent=1 // pred_region
      %s22 = ssub.s32 16, 16
      %23 = vsyncadd [#allocation5], %s22
      %s25 = sshll.u32 %s0, 4
      %s26 = int_to_ptr.vmem [resolvable:$true] %s25
      %28 = dma.vmem_to_smem %s26, 16, [#allocation4], [#allocation5]
    $region5: #{attn_decoder_step.2} parent=1 // pred_fallthru
      _
    // Predicated region
    $region6: #{attn_decoder_step.2} parent=1 // pred_check
      _
    $region7: #{attn_decoder_step.2} parent=1 // pred_check_branch
      %30 = sbr.rel (0) target = $region9
    $region8: #{attn_decoder_step.2} parent=1 // pred_region
      _
    $region9: #{attn_decoder_step.2} parent=1 // pred_fallthru
      _
    // Predicated region
    $region10: #{attn_decoder_step.2} parent=1 // pred_check
      _
    $region11: #{attn_decoder_step.2} parent=1 // pred_check_branch
      %32 = sbr.rel (0) target = $region13
    $region12: #{attn_decoder_step.2} parent=1 // pred_region
      _
    $region13: #{attn_decoder_step.2} parent=1 // pred_fallthru
      _
    // Predicated region
    $region14: #{attn_decoder_step.2} parent=1 // pred_check
      _
    $region15: #{attn_decoder_step.2} parent=1 // pred_check_branch
      %34 = sbr.rel (0) target = $region17
    $region16: #{attn_decoder_step.2} parent=1 // pred_region
      _
    $region17: #{attn_decoder_step.2} parent=1 // pred_fallthru
      _
    // Predicated region
    $region18: #{attn_decoder_step.2} parent=1 // pred_check
      _
    $region19: #{attn_decoder_step.2} parent=1 // pred_check_branch
      %36 = sbr.rel (0) target = $region21
    $region20: #{attn_decoder_step.2} parent=1 // pred_region
      _
    $region21: #{attn_decoder_step.2} parent=1 // pred_fallthru
      _
    // Predicated region
    $region22: #{attn_decoder_step.2} parent=1 // pred_check
      _
    $region23: #{attn_decoder_step.2} parent=1 // pred_check_branch
      %38 = sbr.rel (0) target = $region25
    $region24: #{attn_decoder_step.2} parent=1 // pred_region
      _
    $region25: #{attn_decoder_step.2} parent=1 // pred_fallthru
      _
    // Predicated region
    $region26: #{attn_decoder_step.2} parent=1 // pred_check
      _
    $region27: #{attn_decoder_step.2} parent=1 // pred_check_branch
      %40 = sbr.rel (0) target = $region29
    $region28: #{attn_decoder_step.2} parent=1 // pred_region
      _
    $region29: #{attn_decoder_step.2} parent=1 // pred_fallthru
      _
    // Predicated region
    $region30: #{attn_decoder_step.2} parent=1 // pred_check
      _
    $region31: #{attn_decoder_step.2} parent=1 // pred_check_branch
      %42 = sbr.rel (0) target = $region33
    $region32: #{attn_decoder_step.2} parent=1 // pred_region
      _
    $region33: #{attn_decoder_step.2} parent=1 // pred_fallthru
      _
    // Predicated region
    $region34: #{attn_decoder_step.2} parent=1 // pred_check
      _
    $region35: #{attn_decoder_step.2} parent=1 // pred_check_branch
      %44 = sbr.rel (0) target = $region37
    $region36: #{attn_decoder_step.2} parent=1 // pred_region
      _
    $region37: #{attn_decoder_step.2} parent=1 // pred_fallthru
      _
    // Predicated region
    $region38: #{attn_decoder_step.2} parent=1 // pred_check
      _
    $region39: #{attn_decoder_step.2} parent=1 // pred_check_branch
      %46 = sbr.rel (0) target = $region41
    $region40: #{attn_decoder_step.2} parent=1 // pred_region
      _
    $region41: #{attn_decoder_step.2} parent=1 // pred_fallthru
      _
    // Predicated region
    $region42: #{attn_decoder_step.2} parent=1 // pred_check
      _
    $region43: #{attn_decoder_step.2} parent=1 // pred_check_branch
      %48 = sbr.rel (0) target = $region45
    $region44: #{attn_decoder_step.2} parent=1 // pred_region
      %49 = dma.done [#allocation5], 16
    $region45: #{attn_decoder_step.2} parent=1 // pred_fallthru
      _
    %50 = sfence
    %s52 = sld [smem:[#allocation4]]
    %s53 = scalar_lea.vmem %s1, %s52
    %p55 = scmp.lt.u32.totalorder 1, 8
    %p56 = pneg %p55
    // Predicated region
    $region46: #{attn_decoder_step.2} parent=1 // pred_check
      _
    $region47: #{attn_decoder_step.2} parent=1 // pred_check_branch
      %58 = sbr.rel (%p55) target = $region49
    $region48: #{attn_decoder_step.2} parent=1 // pred_region
      %s73 = sand.u32 1, 7
      %p74 = scmp.eq.s32.totalorder %s73, 0
      %p75 = pneg %p74
      // Predicated region
      $region61: #{attn_decoder_step.2} parent=48 // pred_check
        _
      $region62: #{attn_decoder_step.2} parent=48 // pred_check_branch
        %77 = sbr.rel (%p74) target = $region64
      $region63: #{attn_decoder_step.2} parent=48 // pred_region
        %s78 = sand.u32 1, 7
        %s79 = ssub.s32 1, %s78
        %s80 = scalar_lea.vmem %s53, %s79
        %s81 = ssub.s32 1, %s78
        %s82 = scalar_lea.vmem [#allocation2], %s81
        %s83 = sshllo.u32 0, %s78
        loop: start=0, step=1, limit=1
        $region65: #{attn_decoder_step.2} parent=63 // loop_pre_header
          _
        $region66: #{attn_decoder_step.2} parent=63 // loop_header
          %s85 = sphi 0, %s89
          %p86 = scmp.ge.s32.totalorder %s85, 1
          %s90 = sphi %s80, %s80
          %s91 = sphi %s82, %s82
        $region67: #{attn_decoder_step.2} parent=63 // loop_header_branch
          %88 = sbr.rel (%p86) target = $region71
        $region68: #{attn_decoder_step.2} parent=63 // loop_body
          %v92 = vld [vmem:[%s90] sm:%s83]
          %93 = vst [vmem:[%s91] sm:%s83] %v92
        $region69: #{attn_decoder_step.2} parent=63 // loop_footer
          %s89 = sadd.s32 1, %s85
        $region70: #{attn_decoder_step.2} parent=63 // loop_footer_branch
          %84 = sbr.rel target = $region66
        $region71: #{attn_decoder_step.2} parent=63 // loop_exit
          _
      $region64: #{attn_decoder_step.2} parent=48 // pred_fallthru
        _
    $region49: #{attn_decoder_step.2} parent=1 // pred_fallthru
      _
    // Predicated region
    $region50: #{attn_decoder_step.2} parent=1 // pred_check
      %p59 = pneg %p55
    $region51: #{attn_decoder_step.2} parent=1 // pred_check_branch
      %61 = sbr.rel (%p59) target = $region53
    $region52: #{attn_decoder_step.2} parent=1 // pred_region
      %s62 = sshllo.u32 0, 1
      loop: start=0, step=1, limit=1
      $region54: #{attn_decoder_step.2} parent=52 // loop_pre_header
        _
      $region55: #{attn_decoder_step.2} parent=52 // loop_header
        %s64 = sphi 0, %s68
        %p65 = scmp.ge.s32.totalorder %s64, 1
        %s69 = sphi %s53, %s53
        %s70 = sphi [#allocation2], [#allocation2]
      $region56: #{attn_decoder_step.2} parent=52 // loop_header_branch
        %67 = sbr.rel (%p65) target = $region60
      $region57: #{attn_decoder_step.2} parent=52 // loop_body
        %v71 = vld [vmem:[%s69] sm:%s62]
        %72 = vst [vmem:[%s70] sm:%s62] %v71
      $region58: #{attn_decoder_step.2} parent=52 // loop_footer
        %s68 = sadd.s32 1, %s64
      $region59: #{attn_decoder_step.2} parent=52 // loop_footer_branch
        %63 = sbr.rel target = $region55
      $region60: #{attn_decoder_step.2} parent=52 // loop_exit
        _
    $region53: #{attn_decoder_step.2} parent=1 // pred_fallthru
      _
    // Predicated region
    $region72: #{attn_decoder_step.2} parent=1 // pred_check
      _
    $region73: #{attn_decoder_step.2} parent=1 // pred_check_branch
      %96 = sbr.rel (0) target = $region75
    $region74: #{attn_decoder_step.2} parent=1 // pred_region
      %97 = vsyncadd [#allocation3], 16
    $region75: #{attn_decoder_step.2} parent=1 // pred_fallthru
      _
    %s98 = sld [smem:[#allocation4 + $0x1]]
    %s99 = scalar_lea.vmem %s1, %s98
    %s100 = scalar_lea.vmem [#allocation2], 1
    %s101 = scalar_lea.sflag [#allocation3], 1
    %p103 = scmp.lt.u32.totalorder 1, 8
    %p104 = pneg %p103
    // Predicated region
    $region76: #{attn_decoder_step.2} parent=1 // pred_check
      _
    $region77: #{attn_decoder_step.2} parent=1 // pred_check_branch
      %106 = sbr.rel (%p103) target = $region79
    $region78: #{attn_decoder_step.2} parent=1 // pred_region
      %s121 = sand.u32 1, 7
      %p122 = scmp.eq.s32.totalorder %s121, 0
      %p123 = pneg %p122
      // Predicated region
      $region91: #{attn_decoder_step.2} parent=78 // pred_check
        _
      $region92: #{attn_decoder_step.2} parent=78 // pred_check_branch
        %125 = sbr.rel (%p122) target = $region94
      $region93: #{attn_decoder_step.2} parent=78 // pred_region
        %s126 = sand.u32 1, 7
        %s127 = ssub.s32 1, %s126
        %s128 = scalar_lea.vmem %s99, %s127
        %s129 = ssub.s32 1, %s126
        %s130 = scalar_lea.vmem %s100, %s129 [#allocation2]
        %s131 = sshllo.u32 0, %s126
        loop: start=0, step=1, limit=1
        $region95: #{attn_decoder_step.2} parent=93 // loop_pre_header
          _
        $region96: #{attn_decoder_step.2} parent=93 // loop_header
          %s133 = sphi 0, %s137
          %p134 = scmp.ge.s32.totalorder %s133, 1
          %s138 = sphi %s128, %s128
          %s139 = sphi %s130, %s130
        $region97: #{attn_decoder_step.2} parent=93 // loop_header_branch
          %136 = sbr.rel (%p134) target = $region101
        $region98: #{attn_decoder_step.2} parent=93 // loop_body
          %v140 = vld [vmem:[%s138] sm:%s131]
          %141 = vst [vmem:[%s139] sm:%s131] %v140
        $region99: #{attn_decoder_step.2} parent=93 // loop_footer
          %s137 = sadd.s32 1, %s133
        $region100: #{attn_decoder_step.2} parent=93 // loop_footer_branch
          %132 = sbr.rel target = $region96
        $region101: #{attn_decoder_step.2} parent=93 // loop_exit
          _
      $region94: #{attn_decoder_step.2} parent=78 // pred_fallthru
        _
    $region79: #{attn_decoder_step.2} parent=1 // pred_fallthru
      _
    // Predicated region
    $region80: #{attn_decoder_step.2} parent=1 // pred_check
      %p107 = pneg %p103
    $region81: #{attn_decoder_step.2} parent=1 // pred_check_branch
      %109 = sbr.rel (%p107) target = $region83
    $region82: #{attn_decoder_step.2} parent=1 // pred_region
      %s110 = sshllo.u32 0, 1
      loop: start=0, step=1, limit=1
      $region84: #{attn_decoder_step.2} parent=82 // loop_pre_header
        _
      $region85: #{attn_decoder_step.2} parent=82 // loop_header
        %s112 = sphi 0, %s116
        %p113 = scmp.ge.s32.totalorder %s112, 1
        %s117 = sphi %s99, %s99
        %s118 = sphi %s100, %s100
      $region86: #{attn_decoder_step.2} parent=82 // loop_header_branch
        %115 = sbr.rel (%p113) target = $region90
      $region87: #{attn_decoder_step.2} parent=82 // loop_body
        %v119 = vld [vmem:[%s117] sm:%s110]
        %120 = vst [vmem:[%s118] sm:%s110] %v119
      $region88: #{attn_decoder_step.2} parent=82 // loop_footer
        %s116 = sadd.s32 1, %s112
      $region89: #{attn_decoder_step.2} parent=82 // loop_footer_branch
        %111 = sbr.rel target = $region85
      $region90: #{attn_decoder_step.2} parent=82 // loop_exit
        _
    $region83: #{attn_decoder_step.2} parent=1 // pred_fallthru
      _
    // Predicated region
    $region102: #{attn_decoder_step.2} parent=1 // pred_check
      _
    $region103: #{attn_decoder_step.2} parent=1 // pred_check_branch
      %144 = sbr.rel (0) target = $region105
    $region104: #{attn_decoder_step.2} parent=1 // pred_region
      %145 = vsyncadd %s101, 16
    $region105: #{attn_decoder_step.2} parent=1 // pred_fallthru
      _
    %s146 = sld [smem:[#allocation4]]
    %s147 = smul.u32 1, 1
    %s148 = sshll.u32 %s147, 4
    %149 = dma.done [#allocation3], %s148
    %s150 = sld [smem:[#allocation4 + $0x1]]
    %s151 = sshll.u32 %s147, 4
    %152 = dma.done %s101, %s151
    %v153 = vld [vmem:[#allocation2] sm:$0x3]
    %v154 = vpack.c.bf16 %v153, %v153
    %v155 = vld [vmem:[%s2] sm:$0x3]
    %v156 = vld [vmem:[%s4] sm:$0xf]
    %v157 = vld [vmem:[%s4 + $0x4] sm:$0xf]
    %v158 = vld [vmem:[%s4 + $0x8] sm:$0xf]
    %v159 = vld [vmem:[%s4 + $0xc] sm:$0xf]
    %v160 = vld [vmem:[%s6] sm:$0x1]
    %v162 = vlaneseq
    %v163 = vshrl.u32 %v162, 7
    %v164 = vsub.s32 0, %v163
    %v165 = vrot.slane %v160, %v164
    %v171 = vunpack.c.l.b16 %v156
    %v172 = vunpack.c.l.b16 %v157
    %v173 = vunpack.c.l.b16 %v158
    %v174 = vunpack.c.l.b16 %v159
    %v175 = vpack.c.b16 %v172, %v171
    %v176 = vpack.c.b16 %v174, %v173
    %vm179 = vcmask 261120
    %v181 = vsel %vm179, %v154, 0
    %183 = vmatprep.subr.bf16.mxu0 0
    %184 = vmatpush1.bf16.msra.mxu0 %v175
    %185 = vmatprep.subr.bf16.mxu0 0
    %186 = vmatpush1.bf16.msra.mxu0 %v176
    %187 = vmatprep.subr.bf16.mxu0 0
    %188 = vmatpush1.bf16.msra.mxu0 0
    %189 = vmatprep.subr.bf16.mxu0 0
    %190 = vmatpush1.bf16.msra.mxu0 0
    %191 = vmatprep.subr.bf16.mxu0 0
    %192 = vmatpush1.bf16.msra.mxu0 0
    %193 = vmatprep.subr.bf16.mxu0 0
    %194 = vmatpush1.bf16.msra.mxu0 0
    %195 = vmatprep.subr.bf16.mxu0 0
    %196 = vmatpush1.bf16.msra.mxu0 0
    %197 = vmatprep.subr.bf16.mxu0 0
    %198 = vmatpush1.bf16.msra.mxu0 0
    %199 = vmatprep.subr.bf16.mxu0 0
    %200 = vmatpush1.bf16.msra.mxu0 0
    %201 = vmatprep.subr.bf16.mxu0 0
    %202 = vmatpush1.bf16.msra.mxu0 0
    %203 = vmatprep.subr.bf16.mxu0 0
    %204 = vmatpush1.bf16.msra.mxu0 0
    %205 = vmatprep.subr.bf16.mxu0 0
    %206 = vmatpush1.bf16.msra.mxu0 0
    %207 = vmatprep.subr.bf16.mxu0 0
    %208 = vmatpush1.bf16.msra.mxu0 0
    %209 = vmatprep.subr.bf16.mxu0 0
    %210 = vmatpush1.bf16.msra.mxu0 0
    %211 = vmatprep.subr.bf16.mxu0 0
    %212 = vmatpush1.bf16.msra.mxu0 0
    %213 = vmatprep.subr.bf16.mxu0 0
    %214 = vmatpush1.bf16.msra.mxu0 0
    %215 = vmatprep.mubr.bf16.mxu0 0
    %216 = vmatmul.mubr.bf16.gmra.mrb[0].mxu0 %v181
    %v217 = vpop.f32.mrb[0].mxu0
    %v218 = vadd.f32 %v165, %v217
    %v219 = vpop.f32.mrb[0].mxu0
    %v220 = vpop.f32.mrb[0].mxu0
    %v221 = vpop.f32.mrb[0].mxu0
    %222 = vdwg.mxu0
    %v223 = vpack.c.bf16 %v155, %v155
    %v224 = vld [vmem:[%s5] sm:$0xf]
    %v225 = vld [vmem:[%s5 + $0x4] sm:$0xf]
    %v226 = vld [vmem:[%s5 + $0x8] sm:$0xf]
    %v227 = vld [vmem:[%s5 + $0xc] sm:$0xf]
    %v228 = vld [vmem:[%s7] sm:$0x1]
    %v230 = vlaneseq
    %v231 = vshrl.u32 %v230, 7
    %v232 = vsub.s32 0, %v231
    %v233 = vrot.slane %v228, %v232
    %v239 = vunpack.c.l.b16 %v224
    %v240 = vunpack.c.l.b16 %v225
    %v241 = vunpack.c.l.b16 %v226
    %v242 = vunpack.c.l.b16 %v227
    %v243 = vpack.c.b16 %v240, %v239
    %v244 = vpack.c.b16 %v242, %v241
    %v248 = vsel %vm179, %v223, 0
    %250 = vmatprep.subr.bf16.mxu0 0
    %251 = vmatpush1.bf16.msra.mxu0 %v243
    %252 = vmatprep.subr.bf16.mxu0 0
    %253 = vmatpush1.bf16.msra.mxu0 %v244
    %254 = vmatprep.subr.bf16.mxu0 0
    %255 = vmatpush1.bf16.msra.mxu0 0
    %256 = vmatprep.subr.bf16.mxu0 0
    %257 = vmatpush1.bf16.msra.mxu0 0
    %258 = vmatprep.subr.bf16.mxu0 0
    %259 = vmatpush1.bf16.msra.mxu0 0
    %260 = vmatprep.subr.bf16.mxu0 0
    %261 = vmatpush1.bf16.msra.mxu0 0
    %262 = vmatprep.subr.bf16.mxu0 0
    %263 = vmatpush1.bf16.msra.mxu0 0
    %264 = vmatprep.subr.bf16.mxu0 0
    %265 = vmatpush1.bf16.msra.mxu0 0
    %266 = vmatprep.subr.bf16.mxu0 0
    %267 = vmatpush1.bf16.msra.mxu0 0
    %268 = vmatprep.subr.bf16.mxu0 0
    %269 = vmatpush1.bf16.msra.mxu0 0
    %270 = vmatprep.subr.bf16.mxu0 0
    %271 = vmatpush1.bf16.msra.mxu0 0
    %272 = vmatprep.subr.bf16.mxu0 0
    %273 = vmatpush1.bf16.msra.mxu0 0
    %274 = vmatprep.subr.bf16.mxu0 0
    %275 = vmatpush1.bf16.msra.mxu0 0
    %276 = vmatprep.subr.bf16.mxu0 0
    %277 = vmatpush1.bf16.msra.mxu0 0
    %278 = vmatprep.subr.bf16.mxu0 0
    %279 = vmatpush1.bf16.msra.mxu0 0
    %280 = vmatprep.subr.bf16.mxu0 0
    %281 = vmatpush1.bf16.msra.mxu0 0
    %282 = vmatprep.mubr.bf16.mxu0 0
    %283 = vmatmul.mubr.bf16.gmra.mrb[0].mxu0 %v248
    %v284 = vpop.f32.mrb[0].mxu0
    %v285 = vadd.f32 %v233, %v284
    %v286 = vpop.f32.mrb[0].mxu0
    %v287 = vpop.f32.mrb[0].mxu0
    %v288 = vpop.f32.mrb[0].mxu0
    %289 = vdwg.mxu0
    %v290 = vadd.f32 %v218, %v285
    %v291 = vxor.u32 %v290, 2147483648
    %v292 = vmul.f32 %v291, 1.442695
    %v293 = vpow.pop %v292
    %v294 = vadd.f32 %v293, 1.0
    %v295 = vrcp.pop %v294
    %v296 = vmul.f32 1.0, %v295
    %298 = vrot.lane.b32.xlu0 %v285, 64
    %v299 = vpop.permute.xlu0 %298
    %v301 = vmul.f32 %v296, %v299
    %303 = vrot.lane.b32.xlu0 %v301, 64
    %v304 = vpop.permute.xlu0 %303
    %v306 = vadd.f32 %v218, %v304
    %v307 = vtanh.pop %v306
    %v308 = vsub.f32 1.0, %v296
    %310 = vrot.lane.b32.xlu0 %v307, 96
    %v311 = vpop.permute.xlu0 %310
    %v313 = vmul.f32 %v308, %v311
    %315 = vrot.lane.b32.xlu0 %v155, 32
    %v316 = vpop.permute.xlu0 %315
    %v318 = vmul.f32 %v296, %v316
    %v319 = vadd.f32 %v313, %v318
    %321 = vrot.lane.b32.xlu0 %v319, 96
    %v322 = vpop.permute.xlu0 %321
    %vm324 = vcmask 254976
    %325 = vst.msk [vmem:[%s12] sm:$0x3] %vm324, %v322
    %v326 = vld [vmem:[%s3] sm:$0xf]
    %v327 = vld [vmem:[%s3 + $0x4] sm:$0xf]
    %v328 = vpack.c.bf16 %v319, %v319
    %v331 = vunpack.c.l.s4 1966171168
    %v332 = vunpack.c.0.s8 %v331
    %v333 = vlaneseq
    %v334 = vshrl.u32 %v333, 7
    %v335 = vsub.s32 %v332, %v334
    %v336 = vrot.slane %v328, %v335
    %v338 = vunpack.c.l.s4 1966171168
    %v339 = vunpack.c.0.s8 %v338
    %v340 = vlaneseq
    %v341 = vshrl.u32 %v340, 7
    %v342 = vsub.s32 %v339, %v341
    %v343 = vrot.slane %v336, %v342
    %v344 = vunpack.i.l.s16 %v343
    %v345 = vunpack.i.h.s16 %v343
    %v346 = vpack.i.b16 %v344, %v344
    %v347 = vlaneseq
    %v348 = vshrl.u32 %v347, 7
    %v349 = vsub.s32 0, %v348
    %v350 = vrot.slane %v346, %v349
    %351 = vrot.lane.b32.xlu0 %v350, 96
    %v352 = vpop.permute.xlu0 %351
    %v354 = vsel %vm179, %v352, 0
    %v357 = vsel %vm179, %v326, 0
    %359 = vmatprep.subr.bf16.mxu0 0
    %360 = vmatpush1.bf16.xpose.msra.mxu0 %v357
    %361 = vmatprep.subr.bf16.mxu0 0
    %362 = vmatpush1.bf16.xpose.msra.mxu0 0
    %363 = vmatprep.subr.bf16.mxu0 0
    %364 = vmatpush1.bf16.xpose.msra.mxu0 0
    %365 = vmatprep.subr.bf16.mxu0 0
    %366 = vmatpush1.bf16.xpose.msra.mxu0 0
    %367 = vmatprep.subr.bf16.mxu0 0
    %368 = vmatpush1.bf16.xpose.msra.mxu0 0
    %369 = vmatprep.subr.bf16.mxu0 0
    %370 = vmatpush1.bf16.xpose.msra.mxu0 0
    %371 = vmatprep.subr.bf16.mxu0 0
    %372 = vmatpush1.bf16.xpose.msra.mxu0 0
    %373 = vmatprep.subr.bf16.mxu0 0
    %374 = vmatpush1.bf16.xpose.msra.mxu0 0
    %375 = vmatprep.subr.bf16.mxu0 0
    %376 = vmatpush1.bf16.xpose.msra.mxu0 0
    %377 = vmatprep.subr.bf16.mxu0 0
    %378 = vmatpush1.bf16.xpose.msra.mxu0 0
    %379 = vmatprep.subr.bf16.mxu0 0
    %380 = vmatpush1.bf16.xpose.msra.mxu0 0
    %381 = vmatprep.subr.bf16.mxu0 0
    %382 = vmatpush1.bf16.xpose.msra.mxu0 0
    %383 = vmatprep.subr.bf16.mxu0 0
    %384 = vmatpush1.bf16.xpose.msra.mxu0 0
    %385 = vmatprep.subr.bf16.mxu0 0
    %386 = vmatpush1.bf16.xpose.msra.mxu0 0
    %387 = vmatprep.subr.bf16.mxu0 0
    %388 = vmatpush1.bf16.xpose.msra.mxu0 0
    %389 = vmatprep.subr.bf16.mxu0 0
    %390 = vmatpush1.bf16.xpose.msra.mxu0 0
    %391 = vmatprep.mubr.bf16.mxu0 0
    %392 = vmatmul.mubr.bf16.gmra.mrb[0].mxu0 %v354
    %v393 = vpop.f32.mrb[0].mxu0
    %v394 = vadd.f32 0.0, %v393
    %v395 = vpop.f32.mrb[0].mxu0
    %v396 = vpop.f32.mrb[0].mxu0
    %v397 = vpop.f32.mrb[0].mxu0
    %398 = vdwg.mxu0
    %v399 = vpack.i.b16 %v345, %v345
    %v400 = vlaneseq
    %v401 = vshrl.u32 %v400, 7
    %v402 = vsub.s32 0, %v401
    %v403 = vrot.slane %v399, %v402
    %404 = vrot.lane.b32.xlu0 %v403, 96
    %v405 = vpop.permute.xlu0 %404
    %v407 = vsel %vm179, %v405, 0
    %v410 = vsel %vm179, %v327, 0
    %412 = vmatprep.subr.bf16.mxu0 0
    %413 = vmatpush1.bf16.xpose.msra.mxu0 %v410
    %414 = vmatprep.subr.bf16.mxu0 0
    %415 = vmatpush1.bf16.xpose.msra.mxu0 0
    %416 = vmatprep.subr.bf16.mxu0 0
    %417 = vmatpush1.bf16.xpose.msra.mxu0 0
    %418 = vmatprep.subr.bf16.mxu0 0
    %419 = vmatpush1.bf16.xpose.msra.mxu0 0
    %420 = vmatprep.subr.bf16.mxu0 0
    %421 = vmatpush1.bf16.xpose.msra.mxu0 0
    %422 = vmatprep.subr.bf16.mxu0 0
    %423 = vmatpush1.bf16.xpose.msra.mxu0 0
    %424 = vmatprep.subr.bf16.mxu0 0
    %425 = vmatpush1.bf16.xpose.msra.mxu0 0
    %426 = vmatprep.subr.bf16.mxu0 0
    %427 = vmatpush1.bf16.xpose.msra.mxu0 0
    %428 = vmatprep.subr.bf16.mxu0 0
    %429 = vmatpush1.bf16.xpose.msra.mxu0 0
    %430 = vmatprep.subr.bf16.mxu0 0
    %431 = vmatpush1.bf16.xpose.msra.mxu0 0
    %432 = vmatprep.subr.bf16.mxu0 0
    %433 = vmatpush1.bf16.xpose.msra.mxu0 0
    %434 = vmatprep.subr.bf16.mxu0 0
    %435 = vmatpush1.bf16.xpose.msra.mxu0 0
    %436 = vmatprep.subr.bf16.mxu0 0
    %437 = vmatpush1.bf16.xpose.msra.mxu0 0
    %438 = vmatprep.subr.bf16.mxu0 0
    %439 = vmatpush1.bf16.xpose.msra.mxu0 0
    %440 = vmatprep.subr.bf16.mxu0 0
    %441 = vmatpush1.bf16.xpose.msra.mxu0 0
    %442 = vmatprep.subr.bf16.mxu0 0
    %443 = vmatpush1.bf16.xpose.msra.mxu0 0
    %444 = vmatprep.mubr.bf16.mxu0 0
    %445 = vmatmul.mubr.bf16.gmra.mrb[0].mxu0 %v407
    %v446 = vpop.f32.mrb[0].mxu0
    %v447 = vadd.f32 0.0, %v446
    %v448 = vpop.f32.mrb[0].mxu0
    %v449 = vpop.f32.mrb[0].mxu0
    %v450 = vpop.f32.mrb[0].mxu0
    %451 = vdwg.mxu0
    %vm452 = vcmask 57344
    %v453 = vsel %vm452, %v394, -inf
    %454 = vmax.xlane.f32.xlu0 %v453
    %v455 = vpop.xlane.xlu0 %454
    %v456 = vsel %vm452, %v447, -inf
    %457 = vmax.xlane.f32.xlu0 %v456
    %v458 = vpop.xlane.xlu0 %457
    %v459 = vsub.f32 %v394, %v455
    %v460 = vsub.f32 %v447, %v458
    %v461 = vmul.f32 %v459, 1.442695
    %v462 = vpow.pop %v461
    %v463 = vmul.f32 %v460, 1.442695
    %v464 = vpow.pop %v463
    %v465 = vsel %vm452, %v462, 0.0
    %466 = vadd.xlane.f32.xlu0 %v465
    %v467 = vpop.xlane.xlu0 %466
    %v468 = vsel %vm452, %v464, 0.0
    %469 = vadd.xlane.f32.xlu0 %v468
    %v470 = vpop.xlane.xlu0 %469
    %v471 = vrcp.pop %v467
    %v472 = vmul.f32 %v462, %v471
    %v473 = vrcp.pop %v470
    %v474 = vmul.f32 %v464, %v473
    %v475 = vpack.c.bf16 %v472, %v472
    %v476 = vpack.c.bf16 %v474, %v474
    %vm477 = vcmask 64512
    %v479 = vsel %vm477, %v475, 0
    %vm481 = vcmask 1043456
    %v482 = vsel %vm481, %v326, 0
    %484 = vmatprep.subr.bf16.mxu0 0
    %485 = vmatpush1.bf16.msra.mxu0 %v482
    %486 = vmatprep.subr.bf16.mxu0 0
    %487 = vmatpush1.bf16.msra.mxu0 0
    %488 = vmatprep.subr.bf16.mxu0 0
    %489 = vmatpush1.bf16.msra.mxu0 0
    %490 = vmatprep.subr.bf16.mxu0 0
    %491 = vmatpush1.bf16.msra.mxu0 0
    %492 = vmatprep.subr.bf16.mxu0 0
    %493 = vmatpush1.bf16.msra.mxu0 0
    %494 = vmatprep.subr.bf16.mxu0 0
    %495 = vmatpush1.bf16.msra.mxu0 0
    %496 = vmatprep.subr.bf16.mxu0 0
    %497 = vmatpush1.bf16.msra.mxu0 0
    %498 = vmatprep.subr.bf16.mxu0 0
    %499 = vmatpush1.bf16.msra.mxu0 0
    %500 = vmatprep.subr.bf16.mxu0 0
    %501 = vmatpush1.bf16.msra.mxu0 0
    %502 = vmatprep.subr.bf16.mxu0 0
    %503 = vmatpush1.bf16.msra.mxu0 0
    %504 = vmatprep.subr.bf16.mxu0 0
    %505 = vmatpush1.bf16.msra.mxu0 0
    %506 = vmatprep.subr.bf16.mxu0 0
    %507 = vmatpush1.bf16.msra.mxu0 0
    %508 = vmatprep.subr.bf16.mxu0 0
    %509 = vmatpush1.bf16.msra.mxu0 0
    %510 = vmatprep.subr.bf16.mxu0 0
    %511 = vmatpush1.bf16.msra.mxu0 0
    %512 = vmatprep.subr.bf16.mxu0 0
    %513 = vmatpush1.bf16.msra.mxu0 0
    %514 = vmatprep.subr.bf16.mxu0 0
    %515 = vmatpush1.bf16.msra.mxu0 0
    %516 = vmatprep.mubr.bf16.mxu0 0
    %517 = vmatmul.mubr.bf16.gmra.mrb[0].mxu0 %v479
    %v518 = vpop.f32.mrb[0].mxu0
    %v519 = vadd.f32 0.0, %v518
    %v520 = vpop.f32.mrb[0].mxu0
    %v521 = vpop.f32.mrb[0].mxu0
    %v522 = vpop.f32.mrb[0].mxu0
    %523 = vdwg.mxu0
    %v525 = vsel %vm477, %v476, 0
    %v527 = vsel %vm481, %v327, 0
    %529 = vmatprep.subr.bf16.mxu0 0
    %530 = vmatpush1.bf16.msra.mxu0 %v527
    %531 = vmatprep.subr.bf16.mxu0 0
    %532 = vmatpush1.bf16.msra.mxu0 0
    %533 = vmatprep.subr.bf16.mxu0 0
    %534 = vmatpush1.bf16.msra.mxu0 0
    %535 = vmatprep.subr.bf16.mxu0 0
    %536 = vmatpush1.bf16.msra.mxu0 0
    %537 = vmatprep.subr.bf16.mxu0 0
    %538 = vmatpush1.bf16.msra.mxu0 0
    %539 = vmatprep.subr.bf16.mxu0 0
    %540 = vmatpush1.bf16.msra.mxu0 0
    %541 = vmatprep.subr.bf16.mxu0 0
    %542 = vmatpush1.bf16.msra.mxu0 0
    %543 = vmatprep.subr.bf16.mxu0 0
    %544 = vmatpush1.bf16.msra.mxu0 0
    %545 = vmatprep.subr.bf16.mxu0 0
    %546 = vmatpush1.bf16.msra.mxu0 0
    %547 = vmatprep.subr.bf16.mxu0 0
    %548 = vmatpush1.bf16.msra.mxu0 0
    %549 = vmatprep.subr.bf16.mxu0 0
    %550 = vmatpush1.bf16.msra.mxu0 0
    %551 = vmatprep.subr.bf16.mxu0 0
    %552 = vmatpush1.bf16.msra.mxu0 0
    %553 = vmatprep.subr.bf16.mxu0 0
    %554 = vmatpush1.bf16.msra.mxu0 0
    %555 = vmatprep.subr.bf16.mxu0 0
    %556 = vmatpush1.bf16.msra.mxu0 0
    %557 = vmatprep.subr.bf16.mxu0 0
    %558 = vmatpush1.bf16.msra.mxu0 0
    %559 = vmatprep.subr.bf16.mxu0 0
    %560 = vmatpush1.bf16.msra.mxu0 0
    %561 = vmatprep.mubr.bf16.mxu0 0
    %562 = vmatmul.mubr.bf16.gmra.mrb[0].mxu0 %v525
    %v563 = vpop.f32.mrb[0].mxu0
    %v564 = vadd.f32 0.0, %v563
    %v565 = vpop.f32.mrb[0].mxu0
    %v566 = vpop.f32.mrb[0].mxu0
    %v567 = vpop.f32.mrb[0].mxu0
    %568 = vdwg.mxu0
    %v569 = vld [vmem:[%s8] sm:$0xf]
    %v570 = vld [vmem:[%s8 + $0x4] sm:$0xf]
    %v571 = vld [vmem:[%s8 + $0x8] sm:$0xf]
    %v572 = vld [vmem:[%s8 + $0xc] sm:$0xf]
    %v573 = vpack.c.bf16 %v519, %v519
    %v574 = vpack.c.bf16 %v564, %v564
    %v575 = vld [vmem:[%s9] sm:$0xf]
    %v576 = vld [vmem:[%s9 + $0x4] sm:$0xf]
    %v577 = vld [vmem:[%s9 + $0x8] sm:$0xf]
    %v578 = vld [vmem:[%s9 + $0xc] sm:$0xf]
    %v581 = vunpack.c.l.b16 %v573
    %v582 = vunpack.c.l.b16 %v574
    %v583 = vrot.slane %v582, 7
    %vm584 = vcmask 1041409
    %v585 = vsel %vm584, %v583, %v581
    %v586 = vpack.c.b16 %v585, %v585
    %v591 = vunpack.c.l.b16 %v575
    %v592 = vunpack.c.l.b16 %v576
    %v593 = vunpack.c.l.b16 %v577
    %v594 = vunpack.c.l.b16 %v578
    %v595 = vpack.c.b16 %v592, %v591
    %v596 = vpack.c.b16 %v594, %v593
    %v600 = vsel %vm179, %v586, 0
    %602 = vmatprep.subr.bf16.mxu0 0
    %603 = vmatpush1.bf16.msra.mxu0 %v595
    %604 = vmatprep.subr.bf16.mxu0 0
    %605 = vmatpush1.bf16.msra.mxu0 %v596
    %606 = vmatprep.subr.bf16.mxu0 0
    %607 = vmatpush1.bf16.msra.mxu0 0
    %608 = vmatprep.subr.bf16.mxu0 0
    %609 = vmatpush1.bf16.msra.mxu0 0
    %610 = vmatprep.subr.bf16.mxu0 0
    %611 = vmatpush1.bf16.msra.mxu0 0
    %612 = vmatprep.subr.bf16.mxu0 0
    %613 = vmatpush1.bf16.msra.mxu0 0
    %614 = vmatprep.subr.bf16.mxu0 0
    %615 = vmatpush1.bf16.msra.mxu0 0
    %616 = vmatprep.subr.bf16.mxu0 0
    %617 = vmatpush1.bf16.msra.mxu0 0
    %618 = vmatprep.subr.bf16.mxu0 0
    %619 = vmatpush1.bf16.msra.mxu0 0
    %620 = vmatprep.subr.bf16.mxu0 0
    %621 = vmatpush1.bf16.msra.mxu0 0
    %622 = vmatprep.subr.bf16.mxu0 0
    %623 = vmatpush1.bf16.msra.mxu0 0
    %624 = vmatprep.subr.bf16.mxu0 0
    %625 = vmatpush1.bf16.msra.mxu0 0
    %626 = vmatprep.subr.bf16.mxu0 0
    %627 = vmatpush1.bf16.msra.mxu0 0
    %628 = vmatprep.subr.bf16.mxu0 0
    %629 = vmatpush1.bf16.msra.mxu0 0
    %630 = vmatprep.subr.bf16.mxu0 0
    %631 = vmatpush1.bf16.msra.mxu0 0
    %632 = vmatprep.subr.bf16.mxu0 0
    %633 = vmatpush1.bf16.msra.mxu0 0
    %634 = vmatprep.mubr.bf16.mxu0 0
    %635 = vmatmul.mubr.bf16.gmra.mrb[0].mxu0 %v600
    %v636 = vpop.f32.mrb[0].mxu0
    %v637 = vadd.f32 0.0, %v636
    %v638 = vpop.f32.mrb[0].mxu0
    %v639 = vpop.f32.mrb[0].mxu0
    %v640 = vpop.f32.mrb[0].mxu0
    %641 = vdwg.mxu0
    %642 = vrot.lane.b32.xlu0 %v328, 96
    %v643 = vpop.permute.xlu0 %642
    %v648 = vunpack.c.l.b16 %v569
    %v649 = vunpack.c.l.b16 %v570
    %v650 = vunpack.c.l.b16 %v571
    %v651 = vunpack.c.l.b16 %v572
    %v652 = vpack.c.b16 %v649, %v648
    %v653 = vpack.c.b16 %v651, %v650
    %v657 = vsel %vm179, %v643, 0
    %659 = vmatprep.subr.bf16.mxu0 0
    %660 = vmatpush1.bf16.msra.mxu0 %v652
    %661 = vmatprep.subr.bf16.mxu0 0
    %662 = vmatpush1.bf16.msra.mxu0 %v653
    %663 = vmatprep.subr.bf16.mxu0 0
    %664 = vmatpush1.bf16.msra.mxu0 0
    %665 = vmatprep.subr.bf16.mxu0 0
    %666 = vmatpush1.bf16.msra.mxu0 0
    %667 = vmatprep.subr.bf16.mxu0 0
    %668 = vmatpush1.bf16.msra.mxu0 0
    %669 = vmatprep.subr.bf16.mxu0 0
    %670 = vmatpush1.bf16.msra.mxu0 0
    %671 = vmatprep.subr.bf16.mxu0 0
    %672 = vmatpush1.bf16.msra.mxu0 0
    %673 = vmatprep.subr.bf16.mxu0 0
    %674 = vmatpush1.bf16.msra.mxu0 0
    %675 = vmatprep.subr.bf16.mxu0 0
    %676 = vmatpush1.bf16.msra.mxu0 0
    %677 = vmatprep.subr.bf16.mxu0 0
    %678 = vmatpush1.bf16.msra.mxu0 0
    %679 = vmatprep.subr.bf16.mxu0 0
    %680 = vmatpush1.bf16.msra.mxu0 0
    %681 = vmatprep.subr.bf16.mxu0 0
    %682 = vmatpush1.bf16.msra.mxu0 0
    %683 = vmatprep.subr.bf16.mxu0 0
    %684 = vmatpush1.bf16.msra.mxu0 0
    %685 = vmatprep.subr.bf16.mxu0 0
    %686 = vmatpush1.bf16.msra.mxu0 0
    %687 = vmatprep.subr.bf16.mxu0 0
    %688 = vmatpush1.bf16.msra.mxu0 0
    %689 = vmatprep.subr.bf16.mxu0 0
    %690 = vmatpush1.bf16.msra.mxu0 0
    %691 = vmatprep.mubr.bf16.mxu0 0
    %692 = vmatmul.mubr.bf16.gmra.mrb[0].mxu0 %v657
    %v693 = vpop.f32.mrb[0].mxu0
    %v694 = vadd.f32 %v637, %v693
    %v695 = vpop.f32.mrb[0].mxu0
    %v696 = vpop.f32.mrb[0].mxu0
    %v697 = vpop.f32.mrb[0].mxu0
    %698 = vdwg.mxu0
    %v699 = vld [vmem:[%s10] sm:$0x1]
    %v701 = vlaneseq
    %v702 = vshrl.u32 %v701, 7
    %v703 = vsub.s32 0, %v702
    %v704 = vrot.slane %v699, %v703
    %v706 = vadd.f32 %v694, %v704
    %v707 = vtanh.pop %v706
    %v708 = vpack.c.bf16 %v707, %v707
    %vm709 = vcmask 253952
    %710 = vst.msk [vmem:[%s11] sm:$0x1] %vm709, %v708
    // Predicated region
    $region106: #{attn_decoder_step.2} parent=1 // pred_check
      _
    $region107: #{attn_decoder_step.2} parent=1 // pred_check_branch
      %712 = sbr.rel (0) target = $region109
    $region108: #{attn_decoder_step.2} parent=1 // pred_region
      _
    $region109: #{attn_decoder_step.2} parent=1 // pred_fallthru
      _
    // Predicated region
    $region110: #{attn_decoder_step.2} parent=1 // pred_check
      _
    $region111: #{attn_decoder_step.2} parent=1 // pred_check_branch
      %714 = sbr.rel (0) target = $region113
    $region112: #{attn_decoder_step.2} parent=1 // pred_region
      _
    $region113: #{attn_decoder_step.2} parent=1 // pred_fallthru
      _
    // Predicated region
    $region114: #{attn_decoder_step.2} parent=1 // pred_check
      _
    $region115: #{attn_decoder_step.2} parent=1 // pred_check_branch
      %716 = sbr.rel (0) target = $region117
    $region116: #{attn_decoder_step.2} parent=1 // pred_region
      _
    $region117: #{attn_decoder_step.2} parent=1 // pred_fallthru
      _
    // Predicated region
    $region118: #{attn_decoder_step.2} parent=1 // pred_check
      _
    $region119: #{attn_decoder_step.2} parent=1 // pred_check_branch
      %718 = sbr.rel (0) target = $region121
    $region120: #{attn_decoder_step.2} parent=1 // pred_region
      _
    $region121: #{attn_decoder_step.2} parent=1 // pred_fallthru
      _
    %719 = vsyncpa [#allocation5], 1
  %720 = vsyncmov [#allocation3]
  %s721 = vpop.sfrf %720
  %p722 = scmp.eq.s32.totalorder %s721, 0
  %p723 = pneg %p722
  %725 = shalt.err (%p723)
  %s726 = scalar_lea.sflag [#allocation3], 1
  %727 = vsyncmov %s726
  %s728 = vpop.sfrf %727
  %p729 = scmp.eq.s32.totalorder %s728, 0
  %p730 = pneg %p729
  %732 = shalt.err (%p730)

</llo_original>
